<compile_context>
chip_gen: v7x
topology: tpu7x:2x2x1
jax: 0.10.0
libtpu: 0.0.40
codegen_flags: <defaults>
</compile_context>

<pallas_src>
import math
from functools import partial

import jax
import jax.numpy as jnp
from jax.experimental import pallas as pl
from jax.experimental.pallas import tpu as pltpu


# ----------------------------------------------------------------------------
# Fused whole-encoder Pallas kernel: grid = (batch, layer)
# ----------------------------------------------------------------------------

def _gnn_encoder_kernel(x_ref, wqkv_ref, bqkv_ref, bias_ref, mask_ref,
                        wo_ref, bo_ref, g_ref, beta_ref,
                        out_ref, attn_ref, h_ref,
                        *, num_heads, d_k, d_v, eps):
    # Block shapes (per grid step (b, l)):
    #   x_ref    : (1, L, D)       input node features of batch b (layer 0 only)
    #   wqkv_ref : (1, D, C)       layer-l fused QKV weights, C = H*(2dk+dv)
    #   bqkv_ref : (1, 1, C)
    #   bias_ref : (1, H, L, L)    edge-relation bias of (l, b); masked = -1e30
    #   mask_ref : (1, L, L)       adjacency mask of batch b (layer-invariant)
    #   wo_ref   : (1, H*dv, D)    layer-l output projection
    #   bo/g/beta: (1, 1, D)
    #   out_ref  : (1, L, D)       layer-l output of batch b
    #   attn_ref : (1, H, L, L)
    #   h_ref    : (L, D) VMEM scratch -- running activation, carried over l
    layer = pl.program_id(1)

    @pl.when(layer == 0)
    def _():
        h_ref[...] = x_ref[0].astype(jnp.float32)

    x = h_ref[...]                                            # (L, D)
    # Fused QKV projection; 1/sqrt(d_k) pre-folded into the Q columns.
    qkv = (jnp.dot(x, wqkv_ref[0], preferred_element_type=jnp.float32)
           + bqkv_ref[0])                                     # (L, C)

    mask = mask_ref[0]                                        # (L, L)
    bias = bias_ref[0]                                        # (H, L, L)
    wo = wo_ref[0]                                            # (H*dv, D)

    h_dk = num_heads * d_k
    y = jnp.zeros(x.shape, jnp.float32)                       # (L, D) accum

    for h in range(num_heads):                                # static unroll
        q_h = qkv[:, h * d_k:(h + 1) * d_k]                   # (L, dk)
        k_h = qkv[:, h_dk + h * d_k:h_dk + (h + 1) * d_k]     # (L, dk)
        v_h = qkv[:, 2 * h_dk + h * d_v:2 * h_dk + (h + 1) * d_v]  # (L, dv)

        # Attention logits + edge bias (non-edges already carry -1e30).
        s = jnp.dot(q_h, k_h.T, preferred_element_type=jnp.float32) + bias[h]
        m = jnp.max(s, axis=-1, keepdims=True)
        p = jnp.exp(s - m) * mask                             # isolated rows -> 0
        denom = jnp.sum(p, axis=-1, keepdims=True)
        attn_h = p * pl.reciprocal(jnp.maximum(denom, 1e-9), approx=True)
        attn_ref[0, h] = attn_h

        ctx_h = jnp.dot(attn_h, v_h, preferred_element_type=jnp.float32)
        # Head-concat + output projection fused: ctx @ W_o == sum_h ctx_h @ W_o[h]
        y = y + jnp.dot(ctx_h, wo[h * d_v:(h + 1) * d_v, :],
                        preferred_element_type=jnp.float32)

    y = jnp.maximum(y + bo_ref[0], 0.0)                       # bias + ReLU
    y = x + y                                                 # residual
    mu = jnp.mean(y, axis=-1, keepdims=True)
    var = jnp.mean((y - mu) ** 2, axis=-1, keepdims=True)
    y = (y - mu) * jax.lax.rsqrt(var + eps)                   # LayerNorm
    y = y * g_ref[0] + beta_ref[0]

    h_ref[...] = y                                            # carry to layer l+1
    out_ref[0] = y.astype(out_ref.dtype)


def gnn_encoder_pallas(x, w_qkv, b_qkv, bias_flat, mask_dense,
                       w_o, b_o, ln_g, ln_b,
                       *, num_heads, d_k, d_v, eps=1e-5):
    NL, D, C = w_qkv.shape
    B, L, _ = x.shape
    H = num_heads
    kernel = partial(_gnn_encoder_kernel, num_heads=num_heads,
                     d_k=d_k, d_v=d_v, eps=eps)
    reps, attn = pl.pallas_call(
        kernel,
        out_shape=(jax.ShapeDtypeStruct((NL * B, L, D), jnp.float32),
                   jax.ShapeDtypeStruct((NL * B, H, L, L), jnp.float32)),
        grid=(B, NL),
        in_specs=[
            pl.BlockSpec((1, L, D), lambda b, l: (b, 0, 0)),            # x
            pl.BlockSpec((1, D, C), lambda b, l: (l, 0, 0)),            # w_qkv
            pl.BlockSpec((1, 1, C), lambda b, l: (l, 0, 0)),            # b_qkv
            pl.BlockSpec((1, H, L, L), lambda b, l: (l * B + b, 0, 0, 0)),  # bias
            pl.BlockSpec((1, L, L), lambda b, l: (b, 0, 0)),            # mask
            pl.BlockSpec((1, H * d_v, D), lambda b, l: (l, 0, 0)),      # w_o
            pl.BlockSpec((1, 1, D), lambda b, l: (l, 0, 0)),            # b_o
            pl.BlockSpec((1, 1, D), lambda b, l: (l, 0, 0)),            # ln_g
            pl.BlockSpec((1, 1, D), lambda b, l: (l, 0, 0)),            # ln_b
        ],
        out_specs=(
            pl.BlockSpec((1, L, D), lambda b, l: (l * B + b, 0, 0)),
            pl.BlockSpec((1, H, L, L), lambda b, l: (l * B + b, 0, 0, 0)),
        ),
        scratch_shapes=[pltpu.VMEM((L, D), jnp.float32)],
        compiler_params=pltpu.CompilerParams(
            dimension_semantics=("parallel", "arbitrary"),
            vmem_limit_bytes=32 * 1024 * 1024),   # safe on 64 MiB v7x VMEM
    )(x, w_qkv, b_qkv, bias_flat, mask_dense, w_o, b_o, ln_g, ln_b)
    return reps.reshape(NL, B, L, D), attn.reshape(NL, B, H, L, L)


# ----------------------------------------------------------------------------
# XLA-side glue: dense adjacency mask (layer-invariant, built once) and the
# per-layer edge-relation bias for ALL layers in one batched scatter, with the
# adjacency mask folded in as an additive -1e30 term.
# ----------------------------------------------------------------------------

def build_dense_mask(edge_len_rep, edge_index_rep, B, L):
    max_e = edge_index_rep.shape[1]
    valid = (jnp.arange(max_e)[None, :] < edge_len_rep[:, None])      # [B, E]
    src = edge_index_rep[..., 0]
    dst = edge_index_rep[..., 1]
    b_idx = jnp.broadcast_to(jnp.arange(B)[:, None], (B, max_e))
    mask = jnp.zeros((B, L, L), jnp.float32)
    mask = mask.at[b_idx, dst, src].max(valid.astype(jnp.float32))    # dst x src
    return mask, (b_idx, dst, src, valid)


def build_dense_bias_all(scatter_idx, mask, deprel_edge_rep, deparc_edge_rep,
                         rel_bias_all, arc_bias_all, B, L, H, num_layers):
    # rel_bias_all: [NL, deprel_size, H]; arc_bias_all: [NL, deparc_size, H]
    # NOTE: assumes a duplicate-free edge list (scatter uses .add).
    b_idx, dst, src, valid = scatter_idx
    eb = (rel_bias_all[:, deprel_edge_rep]
          + arc_bias_all[:, deparc_edge_rep])                         # [NL,B,E,H]
    eb = eb * valid[None, :, :, None]
    l_idx = jnp.arange(num_layers)[:, None, None]
    bias = jnp.zeros((num_layers, B, L, L, H), jnp.float32)
    bias = bias.at[l_idx, b_idx[None], dst[None], src[None]].add(eb)
    bias = bias.transpose(0, 1, 4, 2, 3)                              # [NL,B,H,L,L]
    # Fold the adjacency mask as an additive -1e30 term (kernel skips a where).
    bias = bias + (1.0 - mask)[None, :, None, :, :] * (-1e30)
    return bias.reshape(num_layers * B, H, L, L)


def _encoder_forward(params, inp, edge_len_rep, edge_index_rep,
                     deprel_edge_rep, deparc_edge_rep,
                     *, num_heads, d_k, d_v, num_layers):
    B, L, D = inp.shape
    mask_dense, scatter_idx = build_dense_mask(edge_len_rep, edge_index_rep,
                                               B, L)
    bias_flat = build_dense_bias_all(
        scatter_idx, mask_dense, deprel_edge_rep, deparc_edge_rep,
        params["rel_bias"], params["arc_bias"], B, L, num_heads, num_layers)
    return gnn_encoder_pallas(
        inp, params["w_qkv"], params["b_qkv"], bias_flat, mask_dense,
        params["w_o"], params["b_o"], params["ln_g"], params["ln_b"],
        num_heads=num_heads, d_k=d_k, d_v=d_v, eps=1e-5)


# ----------------------------------------------------------------------------
# GNN encoder (forward-pass only, deterministic params)
# ----------------------------------------------------------------------------

class GNNEncoderPallas:
    def __init__(self, num_layers, d_model, num_heads, d_k, d_v,
                 deprel_size, deparc_size, key):
        assert num_heads * d_v == d_model, "concat heads must give d_model"
        self.num_layers = num_layers
        self.d_model = d_model
        self.H = num_heads
        self.d_k = d_k
        self.d_v = d_v

        keys = jax.random.split(key, num_layers)
        q_scale = 1.0 / math.sqrt(d_k)
        s_in = 1.0 / math.sqrt(d_model)
        s_out = 1.0 / math.sqrt(num_heads * d_v)
        C = num_heads * (2 * d_k + d_v)

        w_qkv, rel_bias, arc_bias, w_o = [], [], [], []
        for i in range(num_layers):
            ks = jax.random.split(keys[i], 4)
            w = jax.random.normal(ks[0], (d_model, C), jnp.float32) * s_in
            # Fold the attention scale 1/sqrt(d_k) into the Q projection
            # (b_qkv is zero, so scaling its Q part is a no-op).
            w = w.at[:, :num_heads * d_k].multiply(q_scale)
            w_qkv.append(w)
            rel_bias.append(jax.random.normal(
                ks[1], (deprel_size, num_heads), jnp.float32) * 0.1)
            arc_bias.append(jax.random.normal(
                ks[2], (deparc_size, num_heads), jnp.float32) * 0.1)
            w_o.append(jax.random.normal(
                ks[3], (num_heads * d_v, d_model), jnp.float32) * s_out)

        self.params = dict(
            w_qkv=jnp.stack(w_qkv),                               # [NL, D, C]
            b_qkv=jnp.zeros((num_layers, 1, C), jnp.float32),     # [NL, 1, C]
            rel_bias=jnp.stack(rel_bias),                         # [NL, R, H]
            arc_bias=jnp.stack(arc_bias),                         # [NL, A, H]
            w_o=jnp.stack(w_o),                                   # [NL, H*dv, D]
            b_o=jnp.zeros((num_layers, 1, d_model), jnp.float32),
            ln_g=jnp.ones((num_layers, 1, d_model), jnp.float32),
            ln_b=jnp.zeros((num_layers, 1, d_model), jnp.float32),
        )
        self._fwd = jax.jit(partial(
            _encoder_forward, num_heads=num_heads, d_k=d_k, d_v=d_v,
            num_layers=num_layers))

    def __call__(self, inp, sent_len_rep, edge_len_rep, edge_index_rep,
                 dep_rel_pos_edge_rep, word_rel_pos_edge_rep,
                 deprel_edge_rep, deparc_edge_rep,
                 deprel_path_edge_rep, deparc_path_edge_rep,
                 path_len_edge_rep, dist_edge_rep,
                 deprel_ext_edge_rep, deprel_ext_path_edge_rep):
        assert inp.shape[0] == sent_len_rep.shape[0]
        reps, attn = self._fwd(self.params, inp, edge_len_rep, edge_index_rep,
                               deprel_edge_rep, deparc_edge_rep)
        representations = [reps[i] for i in range(self.num_layers)]   # [B,L,D]
        attention_scores = [attn[i] for i in range(self.num_layers)]  # [B,H,L,L]
        return representations, attention_scores


# ----------------------------------------------------------------------------
# main
# ----------------------------------------------------------------------------

if __name__ == "__main__":
    key = jax.random.PRNGKey(0)
    k_inp, k_rel, k_arc, k_par = jax.random.split(key, 4)

    # small shapes
    B, L, D = 2, 8, 32
    H, d_k, d_v = 4, 8, 8
    num_layers = 2
    deprel_size, deparc_size = 16, 4
    max_edges = 12

    inp = jax.random.normal(k_inp, (B, L, D), jnp.float32)
    sent_len_rep = jnp.array([L, L - 2], jnp.int32)
    edge_len_rep = jnp.array([10, 12], jnp.int32)

    # deterministic, duplicate-free edge list (src, dst) per batch
    e = jnp.arange(max_edges)
    dst = (e % L).astype(jnp.int32)
    src = ((e // L + e) % L).astype(jnp.int32)
    edge_index_rep = jnp.broadcast_to(
        jnp.stack([src, dst], axis=-1)[None],
        (B, max_edges, 2)).astype(jnp.int32)

    deprel_edge_rep = jax.random.randint(k_rel, (B, max_edges), 0, deprel_size,
                                         jnp.int32)
    deparc_edge_rep = jax.random.randint(k_arc, (B, max_edges), 0, deparc_size,
                                         jnp.int32)

    # unused auxiliary inputs (accepted for signature parity)
    zeros_e = jnp.zeros((B, max_edges), jnp.int32)
    zeros_p = jnp.zeros((B, max_edges, 4), jnp.int32)
    dep_rel_pos_edge_rep = zeros_e
    word_rel_pos_edge_rep = zeros_e
    deprel_path_edge_rep = zeros_p
    deparc_path_edge_rep = zeros_p
    path_len_edge_rep = zeros_e
    dist_edge_rep = jnp.zeros((B, max_edges), jnp.float32)
    deprel_ext_edge_rep = zeros_e
    deprel_ext_path_edge_rep = zeros_p

    encoder = GNNEncoderPallas(num_layers=num_layers, d_model=D, num_heads=H,
                               d_k=d_k, d_v=d_v, deprel_size=deprel_size,
                               deparc_size=deparc_size, key=k_par)

    representations, attention_scores = encoder(
        inp, sent_len_rep, edge_len_rep, edge_index_rep,
        dep_rel_pos_edge_rep, word_rel_pos_edge_rep,
        deprel_edge_rep, deparc_edge_rep,
        deprel_path_edge_rep, deparc_path_edge_rep,
        path_len_edge_rep, dist_edge_rep,
        deprel_ext_edge_rep, deprel_ext_path_edge_rep)

    for r in representations:
        jax.block_until_ready(r)
    for a in attention_scores:
        jax.block_until_ready(a)

    assert representations[-1].shape == (B, L, D)
    assert attention_scores[-1].shape == (B, H, L, L)
    assert bool(jnp.all(jnp.isfinite(representations[-1])))
    assert bool(jnp.all(jnp.isfinite(attention_scores[-1])))
    print("KERNEL_OK")
</pallas_src>

<mosaic_0001>
module attributes {stable_mosaic.version = 11 : i64} {
  func.func @_gnn_encoder_kernel(%arg0: i32, %arg1: i32, %arg2: memref<1x8x32xf32, #tpu.memory_space<vmem>>, %arg3: memref<1x32x96xf32, #tpu.memory_space<vmem>>, %arg4: memref<1x1x96xf32, #tpu.memory_space<vmem>>, %arg5: memref<1x4x8x8xf32, #tpu.memory_space<vmem>>, %arg6: memref<1x8x8xf32, #tpu.memory_space<vmem>>, %arg7: memref<1x32x32xf32, #tpu.memory_space<vmem>>, %arg8: memref<1x1x32xf32, #tpu.memory_space<vmem>>, %arg9: memref<1x1x32xf32, #tpu.memory_space<vmem>>, %arg10: memref<1x1x32xf32, #tpu.memory_space<vmem>>, %arg11: memref<1x8x32xf32, #tpu.memory_space<vmem>>, %arg12: memref<1x4x8x8xf32, #tpu.memory_space<vmem>>, %arg13: memref<8x32xf32, #tpu.memory_space<vmem>>) attributes {dimension_semantics = [#tpu.dimension_semantics<parallel>, #tpu.dimension_semantics<arbitrary>], iteration_bounds = array<i64: 2, 2>, scalar_prefetch = 0 : i64, scratch_operands = 1 : i64, tpu.core_type = #tpu.core_type<tc>, window_params = [{transform_indices = @transform_0, window_bounds = array<i64: 1, 8, 32>}, {transform_indices = @transform_1, window_bounds = array<i64: 1, 32, 96>}, {transform_indices = @transform_2, window_bounds = array<i64: 1, 1, 96>}, {transform_indices = @transform_3, window_bounds = array<i64: 1, 4, 8, 8>}, {transform_indices = @transform_4, window_bounds = array<i64: 1, 8, 8>}, {transform_indices = @transform_5, window_bounds = array<i64: 1, 32, 32>}, {transform_indices = @transform_6, window_bounds = array<i64: 1, 1, 32>}, {transform_indices = @transform_7, window_bounds = array<i64: 1, 1, 32>}, {transform_indices = @transform_8, window_bounds = array<i64: 1, 1, 32>}, {transform_indices = @transform_9, window_bounds = array<i64: 1, 8, 32>}, {transform_indices = @transform_10, window_bounds = array<i64: 1, 4, 8, 8>}]} {
    %c0_i32 = arith.constant 0 : i32
    %0 = arith.cmpi eq, %arg1, %c0_i32 : i32
    %1 = arith.extui %0 : i1 to i32
    %c0_i32_0 = arith.constant 0 : i32
    %2 = arith.cmpi ne, %1, %c0_i32_0 : i32
    scf.if %2 {
      %c0_76 = arith.constant 0 : index
      %c0_77 = arith.constant 0 : index
      %c0_78 = arith.constant 0 : index
      %167 = vector.load %arg2[%c0_76, %c0_77, %c0_78] : memref<1x8x32xf32, #tpu.memory_space<vmem>>, vector<1x8x32xf32>
      %168 = vector.shape_cast %167 : vector<1x8x32xf32> to vector<8x32xf32>
      %c0_79 = arith.constant 0 : index
      %c0_80 = arith.constant 0 : index
      %169 = vector.load %arg13[%c0_79, %c0_80] : memref<8x32xf32, #tpu.memory_space<vmem>>, vector<8x32xf32>
      tpu.vector_store %arg13[%c0_79, %c0_80], %168 {strides = array<i32>} : memref<8x32xf32, #tpu.memory_space<vmem>>, vector<8x32xf32>,
    } else {
    }
    %c0 = arith.constant 0 : index
    %c0_1 = arith.constant 0 : index
    %3 = vector.load %arg13[%c0, %c0_1] : memref<8x32xf32, #tpu.memory_space<vmem>>, vector<8x32xf32>
    %c0_2 = arith.constant 0 : index
    %c0_3 = arith.constant 0 : index
    %c0_4 = arith.constant 0 : index
    %4 = vector.load %arg3[%c0_2, %c0_3, %c0_4] : memref<1x32x96xf32, #tpu.memory_space<vmem>>, vector<1x32x96xf32>
    %5 = vector.shape_cast %4 : vector<1x32x96xf32> to vector<32x96xf32>
    %cst = arith.constant dense<0.000000e+00> : vector<8x96xf32>
    %6 = tpu.matmul %3, %5, %cst {dimension_numbers = #tpu.dot_dimension_numbers<[1], [0], [0], [1], [0, 0, 1, 1], [], []>} : vector<8x32xf32>, vector<32x96xf32>, vector<8x96xf32> -> vector<8x96xf32>
    %c0_5 = arith.constant 0 : index
    %c0_6 = arith.constant 0 : index
    %c0_7 = arith.constant 0 : index
    %7 = vector.load %arg4[%c0_5, %c0_6, %c0_7] : memref<1x1x96xf32, #tpu.memory_space<vmem>>, vector<1x1x96xf32>
    %8 = vector.shape_cast %7 : vector<1x1x96xf32> to vector<1x96xf32>
    %9 = vector.broadcast %8 : vector<1x96xf32> to vector<8x96xf32>
    %10 = arith.addf %6, %9 : vector<8x96xf32>
    %c0_8 = arith.constant 0 : index
    %c0_9 = arith.constant 0 : index
    %c0_10 = arith.constant 0 : index
    %11 = vector.load %arg6[%c0_8, %c0_9, %c0_10] : memref<1x8x8xf32, #tpu.memory_space<vmem>>, vector<1x8x8xf32>
    %12 = vector.shape_cast %11 : vector<1x8x8xf32> to vector<8x8xf32>
    %c0_11 = arith.constant 0 : index
    %c0_12 = arith.constant 0 : index
    %c0_13 = arith.constant 0 : index
    %c0_14 = arith.constant 0 : index
    %13 = vector.load %arg5[%c0_11, %c0_12, %c0_13, %c0_14] : memref<1x4x8x8xf32, #tpu.memory_space<vmem>>, vector<1x4x8x8xf32>
    %14 = vector.shape_cast %13 : vector<1x4x8x8xf32> to vector<4x8x8xf32>
    %c0_15 = arith.constant 0 : index
    %c0_16 = arith.constant 0 : index
    %c0_17 = arith.constant 0 : index
    %15 = vector.load %arg7[%c0_15, %c0_16, %c0_17] : memref<1x32x32xf32, #tpu.memory_space<vmem>>, vector<1x32x32xf32>
    %16 = vector.shape_cast %15 : vector<1x32x32xf32> to vector<32x32xf32>
    %cst_18 = arith.constant 0.000000e+00 : f32
    %17 = vector.broadcast %cst_18 : f32 to vector<8x32xf32>
    %18 = vector.extract_strided_slice %10 {offsets = [0, 0], sizes = [8, 8], strides = [1, 1]} : vector<8x96xf32> to vector<8x8xf32>
    %19 = vector.extract_strided_slice %10 {offsets = [0, 32], sizes = [8, 8], strides = [1, 1]} : vector<8x96xf32> to vector<8x8xf32>
    %20 = vector.extract_strided_slice %10 {offsets = [0, 64], sizes = [8, 8], strides = [1, 1]} : vector<8x96xf32> to vector<8x8xf32>
    %21 = tpu.transpose %19, [1, 0] : vector<8x8xf32> -> vector<8x8xf32>
    %cst_19 = arith.constant dense<0.000000e+00> : vector<8x8xf32>
    %22 = tpu.matmul %18, %21, %cst_19 {dimension_numbers = #tpu.dot_dimension_numbers<[1], [0], [0], [1], [0, 0, 1, 1], [], []>} : vector<8x8xf32>, vector<8x8xf32>, vector<8x8xf32> -> vector<8x8xf32>
    %23 = vector.extract_strided_slice %14 {offsets = [0, 0, 0], sizes = [1, 8, 8], strides = [1, 1, 1]} : vector<4x8x8xf32> to vector<1x8x8xf32>
    %24 = vector.shape_cast %23 : vector<1x8x8xf32> to vector<8x8xf32>
    %25 = arith.addf %22, %24 : vector<8x8xf32>
    %cst_20 = arith.constant dense<0xFF800000> : vector<8xf32>
    %26 = vector.multi_reduction <maximumf>, %25, %cst_20 [1] : vector<8x8xf32> to vector<8xf32>
    %27 = vector.shape_cast %26 : vector<8xf32> to vector<8x1xf32>
    %28 = vector.broadcast %27 : vector<8x1xf32> to vector<8x8xf32>
    %29 = arith.subf %25, %28 : vector<8x8xf32>
    %30 = math.exp %29 : vector<8x8xf32>
    %31 = arith.mulf %30, %12 : vector<8x8xf32>
    %cst_21 = arith.constant dense<0.000000e+00> : vector<8xf32>
    %32 = vector.multi_reduction <add>, %31, %cst_21 [1] : vector<8x8xf32> to vector<8xf32>
    %33 = vector.shape_cast %32 : vector<8xf32> to vector<8x1xf32>
    %cst_22 = arith.constant 9.99999971E-10 : f32
    %34 = vector.broadcast %cst_22 : f32 to vector<8x1xf32>
    %35 = arith.maximumf %33, %34 : vector<8x1xf32>
    %36 = tpu.reciprocal %35 {approx = true} : vector<8x1xf32> -> vector<8x1xf32>
    %37 = vector.broadcast %36 : vector<8x1xf32> to vector<8x8xf32>
    %38 = arith.mulf %31, %37 : vector<8x8xf32>
    %c0_23 = arith.constant 0 : index
    %c0_24 = arith.constant 0 : index
    %c0_25 = arith.constant 0 : index
    %c0_26 = arith.constant 0 : index
    %39 = vector.load %arg12[%c0_23, %c0_24, %c0_25, %c0_26] : memref<1x4x8x8xf32, #tpu.memory_space<vmem>>, vector<1x1x8x8xf32>
    %40 = vector.shape_cast %39 : vector<1x1x8x8xf32> to vector<8x8xf32>
    %41 = vector.shape_cast %38 : vector<8x8xf32> to vector<1x1x8x8xf32>
    tpu.vector_store %arg12[%c0_23, %c0_24, %c0_25, %c0_26], %41 {strides = array<i32>} : memref<1x4x8x8xf32, #tpu.memory_space<vmem>>, vector<1x1x8x8xf32>,
    %cst_27 = arith.constant dense<0.000000e+00> : vector<8x8xf32>
    %42 = tpu.matmul %38, %20, %cst_27 {dimension_numbers = #tpu.dot_dimension_numbers<[1], [0], [0], [1], [0, 0, 1, 1], [], []>} : vector<8x8xf32>, vector<8x8xf32>, vector<8x8xf32> -> vector<8x8xf32>
    %43 = vector.extract_strided_slice %16 {offsets = [0, 0], sizes = [8, 32], strides = [1, 1]} : vector<32x32xf32> to vector<8x32xf32>
    %cst_28 = arith.constant dense<0.000000e+00> : vector<8x32xf32>
    %44 = tpu.matmul %42, %43, %cst_28 {dimension_numbers = #tpu.dot_dimension_numbers<[1], [0], [0], [1], [0, 0, 1, 1], [], []>} : vector<8x8xf32>, vector<8x32xf32>, vector<8x32xf32> -> vector<8x32xf32>
    %45 = arith.addf %17, %44 : vector<8x32xf32>
    %46 = vector.extract_strided_slice %10 {offsets = [0, 8], sizes = [8, 8], strides = [1, 1]} : vector<8x96xf32> to vector<8x8xf32>
    %47 = vector.extract_strided_slice %10 {offsets = [0, 40], sizes = [8, 8], strides = [1, 1]} : vector<8x96xf32> to vector<8x8xf32>
    %48 = vector.extract_strided_slice %10 {offsets = [0, 72], sizes = [8, 8], strides = [1, 1]} : vector<8x96xf32> to vector<8x8xf32>
    %49 = tpu.transpose %47, [1, 0] : vector<8x8xf32> -> vector<8x8xf32>
    %cst_29 = arith.constant dense<0.000000e+00> : vector<8x8xf32>
    %50 = tpu.matmul %46, %49, %cst_29 {dimension_numbers = #tpu.dot_dimension_numbers<[1], [0], [0], [1], [0, 0, 1, 1], [], []>} : vector<8x8xf32>, vector<8x8xf32>, vector<8x8xf32> -> vector<8x8xf32>
    %51 = vector.extract_strided_slice %14 {offsets = [1, 0, 0], sizes = [1, 8, 8], strides = [1, 1, 1]} : vector<4x8x8xf32> to vector<1x8x8xf32>
    %52 = vector.shape_cast %51 : vector<1x8x8xf32> to vector<8x8xf32>
    %53 = arith.addf %50, %52 : vector<8x8xf32>
    %cst_30 = arith.constant dense<0xFF800000> : vector<8xf32>
    %54 = vector.multi_reduction <maximumf>, %53, %cst_30 [1] : vector<8x8xf32> to vector<8xf32>
    %55 = vector.shape_cast %54 : vector<8xf32> to vector<8x1xf32>
    %56 = vector.broadcast %55 : vector<8x1xf32> to vector<8x8xf32>
    %57 = arith.subf %53, %56 : vector<8x8xf32>
    %58 = math.exp %57 : vector<8x8xf32>
    %59 = arith.mulf %58, %12 : vector<8x8xf32>
    %cst_31 = arith.constant dense<0.000000e+00> : vector<8xf32>
    %60 = vector.multi_reduction <add>, %59, %cst_31 [1] : vector<8x8xf32> to vector<8xf32>
    %61 = vector.shape_cast %60 : vector<8xf32> to vector<8x1xf32>
    %cst_32 = arith.constant 9.99999971E-10 : f32
    %62 = vector.broadcast %cst_32 : f32 to vector<8x1xf32>
    %63 = arith.maximumf %61, %62 : vector<8x1xf32>
    %64 = tpu.reciprocal %63 {approx = true} : vector<8x1xf32> -> vector<8x1xf32>
    %65 = vector.broadcast %64 : vector<8x1xf32> to vector<8x8xf32>
    %66 = arith.mulf %59, %65 : vector<8x8xf32>
    %c0_33 = arith.constant 0 : index
    %c1 = arith.constant 1 : index
    %c0_34 = arith.constant 0 : index
    %c0_35 = arith.constant 0 : index
    %67 = vector.load %arg12[%c0_33, %c1, %c0_34, %c0_35] : memref<1x4x8x8xf32, #tpu.memory_space<vmem>>, vector<1x1x8x8xf32>
    %68 = vector.shape_cast %67 : vector<1x1x8x8xf32> to vector<8x8xf32>
    %69 = vector.shape_cast %66 : vector<8x8xf32> to vector<1x1x8x8xf32>
    tpu.vector_store %arg12[%c0_33, %c1, %c0_34, %c0_35], %69 {strides = array<i32>} : memref<1x4x8x8xf32, #tpu.memory_space<vmem>>, vector<1x1x8x8xf32>,
    %cst_36 = arith.constant dense<0.000000e+00> : vector<8x8xf32>
    %70 = tpu.matmul %66, %48, %cst_36 {dimension_numbers = #tpu.dot_dimension_numbers<[1], [0], [0], [1], [0, 0, 1, 1], [], []>} : vector<8x8xf32>, vector<8x8xf32>, vector<8x8xf32> -> vector<8x8xf32>
    %71 = vector.extract_strided_slice %16 {offsets = [8, 0], sizes = [8, 32], strides = [1, 1]} : vector<32x32xf32> to vector<8x32xf32>
    %cst_37 = arith.constant dense<0.000000e+00> : vector<8x32xf32>
    %72 = tpu.matmul %70, %71, %cst_37 {dimension_numbers = #tpu.dot_dimension_numbers<[1], [0], [0], [1], [0, 0, 1, 1], [], []>} : vector<8x8xf32>, vector<8x32xf32>, vector<8x32xf32> -> vector<8x32xf32>
    %73 = arith.addf %45, %72 : vector<8x32xf32>
    %74 = vector.extract_strided_slice %10 {offsets = [0, 16], sizes = [8, 8], strides = [1, 1]} : vector<8x96xf32> to vector<8x8xf32>
    %75 = vector.extract_strided_slice %10 {offsets = [0, 48], sizes = [8, 8], strides = [1, 1]} : vector<8x96xf32> to vector<8x8xf32>
    %76 = vector.extract_strided_slice %10 {offsets = [0, 80], sizes = [8, 8], strides = [1, 1]} : vector<8x96xf32> to vector<8x8xf32>
    %77 = tpu.transpose %75, [1, 0] : vector<8x8xf32> -> vector<8x8xf32>
    %cst_38 = arith.constant dense<0.000000e+00> : vector<8x8xf32>
    %78 = tpu.matmul %74, %77, %cst_38 {dimension_numbers = #tpu.dot_dimension_numbers<[1], [0], [0], [1], [0, 0, 1, 1], [], []>} : vector<8x8xf32>, vector<8x8xf32>, vector<8x8xf32> -> vector<8x8xf32>
    %79 = vector.extract_strided_slice %14 {offsets = [2, 0, 0], sizes = [1, 8, 8], strides = [1, 1, 1]} : vector<4x8x8xf32> to vector<1x8x8xf32>
    %80 = vector.shape_cast %79 : vector<1x8x8xf32> to vector<8x8xf32>
    %81 = arith.addf %78, %80 : vector<8x8xf32>
    %cst_39 = arith.constant dense<0xFF800000> : vector<8xf32>
    %82 = vector.multi_reduction <maximumf>, %81, %cst_39 [1] : vector<8x8xf32> to vector<8xf32>
    %83 = vector.shape_cast %82 : vector<8xf32> to vector<8x1xf32>
    %84 = vector.broadcast %83 : vector<8x1xf32> to vector<8x8xf32>
    %85 = arith.subf %81, %84 : vector<8x8xf32>
    %86 = math.exp %85 : vector<8x8xf32>
    %87 = arith.mulf %86, %12 : vector<8x8xf32>
    %cst_40 = arith.constant dense<0.000000e+00> : vector<8xf32>
    %88 = vector.multi_reduction <add>, %87, %cst_40 [1] : vector<8x8xf32> to vector<8xf32>
    %89 = vector.shape_cast %88 : vector<8xf32> to vector<8x1xf32>
    %cst_41 = arith.constant 9.99999971E-10 : f32
    %90 = vector.broadcast %cst_41 : f32 to vector<8x1xf32>
    %91 = arith.maximumf %89, %90 : vector<8x1xf32>
    %92 = tpu.reciprocal %91 {approx = true} : vector<8x1xf32> -> vector<8x1xf32>
    %93 = vector.broadcast %92 : vector<8x1xf32> to vector<8x8xf32>
    %94 = arith.mulf %87, %93 : vector<8x8xf32>
    %c0_42 = arith.constant 0 : index
    %c2 = arith.constant 2 : index
    %c0_43 = arith.constant 0 : index
    %c0_44 = arith.constant 0 : index
    %95 = vector.load %arg12[%c0_42, %c2, %c0_43, %c0_44] : memref<1x4x8x8xf32, #tpu.memory_space<vmem>>, vector<1x1x8x8xf32>
    %96 = vector.shape_cast %95 : vector<1x1x8x8xf32> to vector<8x8xf32>
    %97 = vector.shape_cast %94 : vector<8x8xf32> to vector<1x1x8x8xf32>
    tpu.vector_store %arg12[%c0_42, %c2, %c0_43, %c0_44], %97 {strides = array<i32>} : memref<1x4x8x8xf32, #tpu.memory_space<vmem>>, vector<1x1x8x8xf32>,
    %cst_45 = arith.constant dense<0.000000e+00> : vector<8x8xf32>
    %98 = tpu.matmul %94, %76, %cst_45 {dimension_numbers = #tpu.dot_dimension_numbers<[1], [0], [0], [1], [0, 0, 1, 1], [], []>} : vector<8x8xf32>, vector<8x8xf32>, vector<8x8xf32> -> vector<8x8xf32>
    %99 = vector.extract_strided_slice %16 {offsets = [16, 0], sizes = [8, 32], strides = [1, 1]} : vector<32x32xf32> to vector<8x32xf32>
    %cst_46 = arith.constant dense<0.000000e+00> : vector<8x32xf32>
    %100 = tpu.matmul %98, %99, %cst_46 {dimension_numbers = #tpu.dot_dimension_numbers<[1], [0], [0], [1], [0, 0, 1, 1], [], []>} : vector<8x8xf32>, vector<8x32xf32>, vector<8x32xf32> -> vector<8x32xf32>
    %101 = arith.addf %73, %100 : vector<8x32xf32>
    %102 = vector.extract_strided_slice %10 {offsets = [0, 24], sizes = [8, 8], strides = [1, 1]} : vector<8x96xf32> to vector<8x8xf32>
    %103 = vector.extract_strided_slice %10 {offsets = [0, 56], sizes = [8, 8], strides = [1, 1]} : vector<8x96xf32> to vector<8x8xf32>
    %104 = vector.extract_strided_slice %10 {offsets = [0, 88], sizes = [8, 8], strides = [1, 1]} : vector<8x96xf32> to vector<8x8xf32>
    %105 = tpu.transpose %103, [1, 0] : vector<8x8xf32> -> vector<8x8xf32>
    %cst_47 = arith.constant dense<0.000000e+00> : vector<8x8xf32>
    %106 = tpu.matmul %102, %105, %cst_47 {dimension_numbers = #tpu.dot_dimension_numbers<[1], [0], [0], [1], [0, 0, 1, 1], [], []>} : vector<8x8xf32>, vector<8x8xf32>, vector<8x8xf32> -> vector<8x8xf32>
    %107 = vector.extract_strided_slice %14 {offsets = [3, 0, 0], sizes = [1, 8, 8], strides = [1, 1, 1]} : vector<4x8x8xf32> to vector<1x8x8xf32>
    %108 = vector.shape_cast %107 : vector<1x8x8xf32> to vector<8x8xf32>
    %109 = arith.addf %106, %108 : vector<8x8xf32>
    %cst_48 = arith.constant dense<0xFF800000> : vector<8xf32>
    %110 = vector.multi_reduction <maximumf>, %109, %cst_48 [1] : vector<8x8xf32> to vector<8xf32>
    %111 = vector.shape_cast %110 : vector<8xf32> to vector<8x1xf32>
    %112 = vector.broadcast %111 : vector<8x1xf32> to vector<8x8xf32>
    %113 = arith.subf %109, %112 : vector<8x8xf32>
    %114 = math.exp %113 : vector<8x8xf32>
    %115 = arith.mulf %114, %12 : vector<8x8xf32>
    %cst_49 = arith.constant dense<0.000000e+00> : vector<8xf32>
    %116 = vector.multi_reduction <add>, %115, %cst_49 [1] : vector<8x8xf32> to vector<8xf32>
    %117 = vector.shape_cast %116 : vector<8xf32> to vector<8x1xf32>
    %cst_50 = arith.constant 9.99999971E-10 : f32
    %118 = vector.broadcast %cst_50 : f32 to vector<8x1xf32>
    %119 = arith.maximumf %117, %118 : vector<8x1xf32>
    %120 = tpu.reciprocal %119 {approx = true} : vector<8x1xf32> -> vector<8x1xf32>
    %121 = vector.broadcast %120 : vector<8x1xf32> to vector<8x8xf32>
    %122 = arith.mulf %115, %121 : vector<8x8xf32>
    %c0_51 = arith.constant 0 : index
    %c3 = arith.constant 3 : index
    %c0_52 = arith.constant 0 : index
    %c0_53 = arith.constant 0 : index
    %123 = vector.load %arg12[%c0_51, %c3, %c0_52, %c0_53] : memref<1x4x8x8xf32, #tpu.memory_space<vmem>>, vector<1x1x8x8xf32>
    %124 = vector.shape_cast %123 : vector<1x1x8x8xf32> to vector<8x8xf32>
    %125 = vector.shape_cast %122 : vector<8x8xf32> to vector<1x1x8x8xf32>
    tpu.vector_store %arg12[%c0_51, %c3, %c0_52, %c0_53], %125 {strides = array<i32>} : memref<1x4x8x8xf32, #tpu.memory_space<vmem>>, vector<1x1x8x8xf32>,
    %cst_54 = arith.constant dense<0.000000e+00> : vector<8x8xf32>
    %126 = tpu.matmul %122, %104, %cst_54 {dimension_numbers = #tpu.dot_dimension_numbers<[1], [0], [0], [1], [0, 0, 1, 1], [], []>} : vector<8x8xf32>, vector<8x8xf32>, vector<8x8xf32> -> vector<8x8xf32>
    %127 = vector.extract_strided_slice %16 {offsets = [24, 0], sizes = [8, 32], strides = [1, 1]} : vector<32x32xf32> to vector<8x32xf32>
    %cst_55 = arith.constant dense<0.000000e+00> : vector<8x32xf32>
    %128 = tpu.matmul %126, %127, %cst_55 {dimension_numbers = #tpu.dot_dimension_numbers<[1], [0], [0], [1], [0, 0, 1, 1], [], []>} : vector<8x8xf32>, vector<8x32xf32>, vector<8x32xf32> -> vector<8x32xf32>
    %129 = arith.addf %101, %128 : vector<8x32xf32>
    %c0_56 = arith.constant 0 : index
    %c0_57 = arith.constant 0 : index
    %c0_58 = arith.constant 0 : index
    %130 = vector.load %arg8[%c0_56, %c0_57, %c0_58] : memref<1x1x32xf32, #tpu.memory_space<vmem>>, vector<1x1x32xf32>
    %131 = vector.shape_cast %130 : vector<1x1x32xf32> to vector<1x32xf32>
    %132 = vector.broadcast %131 : vector<1x32xf32> to vector<8x32xf32>
    %133 = arith.addf %129, %132 : vector<8x32xf32>
    %cst_59 = arith.constant 0.000000e+00 : f32
    %134 = vector.broadcast %cst_59 : f32 to vector<8x32xf32>
    %135 = arith.maximumf %133, %134 : vector<8x32xf32>
    %136 = arith.addf %3, %135 : vector<8x32xf32>
    %cst_60 = arith.constant dense<0.000000e+00> : vector<8xf32>
    %137 = vector.multi_reduction <add>, %136, %cst_60 [1] : vector<8x32xf32> to vector<8xf32>
    %138 = vector.shape_cast %137 : vector<8xf32> to vector<8x1xf32>
    %cst_61 = arith.constant 3.200000e+01 : f32
    %139 = vector.broadcast %cst_61 : f32 to vector<8x1xf32>
    %140 = arith.divf %138, %139 : vector<8x1xf32>
    %141 = vector.broadcast %140 : vector<8x1xf32> to vector<8x32xf32>
    %142 = arith.subf %136, %141 : vector<8x32xf32>
    %143 = arith.mulf %142, %142 : vector<8x32xf32>
    %cst_62 = arith.constant dense<0.000000e+00> : vector<8xf32>
    %144 = vector.multi_reduction <add>, %143, %cst_62 [1] : vector<8x32xf32> to vector<8xf32>
    %145 = vector.shape_cast %144 : vector<8xf32> to vector<8x1xf32>
    %cst_63 = arith.constant 3.200000e+01 : f32
    %146 = vector.broadcast %cst_63 : f32 to vector<8x1xf32>
    %147 = arith.divf %145, %146 : vector<8x1xf32>
    %148 = vector.broadcast %140 : vector<8x1xf32> to vector<8x32xf32>
    %149 = arith.subf %136, %148 : vector<8x32xf32>
    %cst_64 = arith.constant 9.99999974E-6 : f32
    %150 = vector.broadcast %cst_64 : f32 to vector<8x1xf32>
    %151 = arith.addf %147, %150 : vector<8x1xf32>
    %152 = math.rsqrt %151 : vector<8x1xf32>
    %153 = vector.broadcast %152 : vector<8x1xf32> to vector<8x32xf32>
    %154 = arith.mulf %149, %153 : vector<8x32xf32>
    %c0_65 = arith.constant 0 : index
    %c0_66 = arith.constant 0 : index
    %c0_67 = arith.constant 0 : index
    %155 = vector.load %arg9[%c0_65, %c0_66, %c0_67] : memref<1x1x32xf32, #tpu.memory_space<vmem>>, vector<1x1x32xf32>
    %156 = vector.shape_cast %155 : vector<1x1x32xf32> to vector<1x32xf32>
    %157 = vector.broadcast %156 : vector<1x32xf32> to vector<8x32xf32>
    %158 = arith.mulf %154, %157 : vector<8x32xf32>
    %c0_68 = arith.constant 0 : index
    %c0_69 = arith.constant 0 : index
    %c0_70 = arith.constant 0 : index
    %159 = vector.load %arg10[%c0_68, %c0_69, %c0_70] : memref<1x1x32xf32, #tpu.memory_space<vmem>>, vector<1x1x32xf32>
    %160 = vector.shape_cast %159 : vector<1x1x32xf32> to vector<1x32xf32>
    %161 = vector.broadcast %160 : vector<1x32xf32> to vector<8x32xf32>
    %162 = arith.addf %158, %161 : vector<8x32xf32>
    %c0_71 = arith.constant 0 : index
    %c0_72 = arith.constant 0 : index
    %163 = vector.load %arg13[%c0_71, %c0_72] : memref<8x32xf32, #tpu.memory_space<vmem>>, vector<8x32xf32>
    tpu.vector_store %arg13[%c0_71, %c0_72], %162 {strides = array<i32>} : memref<8x32xf32, #tpu.memory_space<vmem>>, vector<8x32xf32>,
    %c0_73 = arith.constant 0 : index
    %c0_74 = arith.constant 0 : index
    %c0_75 = arith.constant 0 : index
    %164 = vector.load %arg11[%c0_73, %c0_74, %c0_75] : memref<1x8x32xf32, #tpu.memory_space<vmem>>, vector<1x8x32xf32>
    %165 = vector.shape_cast %164 : vector<1x8x32xf32> to vector<8x32xf32>
    %166 = vector.shape_cast %162 : vector<8x32xf32> to vector<1x8x32xf32>
    tpu.vector_store %arg11[%c0_73, %c0_74, %c0_75], %166 {strides = array<i32>} : memref<1x8x32xf32, #tpu.memory_space<vmem>>, vector<1x8x32xf32>,
    return
  }
  func.func @transform_0(%arg0: i32, %arg1: i32) -> (i32, i32, i32) {
    %c0_i32 = arith.constant 0 : i32
    %c0_i32_0 = arith.constant 0 : i32
    %c0_i32_1 = arith.constant 0 : i32
    return %arg0, %c0_i32, %c0_i32_0 : i32, i32, i32
  }
  func.func @transform_1(%arg0: i32, %arg1: i32) -> (i32, i32, i32) {
    %c0_i32 = arith.constant 0 : i32
    %c0_i32_0 = arith.constant 0 : i32
    %c0_i32_1 = arith.constant 0 : i32
    return %arg1, %c0_i32, %c0_i32_0 : i32, i32, i32
  }
  func.func @transform_2(%arg0: i32, %arg1: i32) -> (i32, i32, i32) {
    %c0_i32 = arith.constant 0 : i32
    %c0_i32_0 = arith.constant 0 : i32
    %c0_i32_1 = arith.constant 0 : i32
    return %arg1, %c0_i32, %c0_i32_0 : i32, i32, i32
  }
  func.func @transform_3(%arg0: i32, %arg1: i32) -> (i32, i32, i32, i32) {
    %c2_i32 = arith.constant 2 : i32
    %0 = arith.muli %arg1, %c2_i32 : i32
    %1 = arith.addi %0, %arg0 : i32
    %c0_i32 = arith.constant 0 : i32
    %c0_i32_0 = arith.constant 0 : i32
    %c0_i32_1 = arith.constant 0 : i32
    %c0_i32_2 = arith.constant 0 : i32
    return %1, %c0_i32, %c0_i32_0, %c0_i32_1 : i32, i32, i32, i32
  }
  func.func @transform_4(%arg0: i32, %arg1: i32) -> (i32, i32, i32) {
    %c0_i32 = arith.constant 0 : i32
    %c0_i32_0 = arith.constant 0 : i32
    %c0_i32_1 = arith.constant 0 : i32
    return %arg0, %c0_i32, %c0_i32_0 : i32, i32, i32
  }
  func.func @transform_5(%arg0: i32, %arg1: i32) -> (i32, i32, i32) {
    %c0_i32 = arith.constant 0 : i32
    %c0_i32_0 = arith.constant 0 : i32
    %c0_i32_1 = arith.constant 0 : i32
    return %arg1, %c0_i32, %c0_i32_0 : i32, i32, i32
  }
  func.func @transform_6(%arg0: i32, %arg1: i32) -> (i32, i32, i32) {
    %c0_i32 = arith.constant 0 : i32
    %c0_i32_0 = arith.constant 0 : i32
    %c0_i32_1 = arith.constant 0 : i32
    return %arg1, %c0_i32, %c0_i32_0 : i32, i32, i32
  }
  func.func @transform_7(%arg0: i32, %arg1: i32) -> (i32, i32, i32) {
    %c0_i32 = arith.constant 0 : i32
    %c0_i32_0 = arith.constant 0 : i32
    %c0_i32_1 = arith.constant 0 : i32
    return %arg1, %c0_i32, %c0_i32_0 : i32, i32, i32
  }
  func.func @transform_8(%arg0: i32, %arg1: i32) -> (i32, i32, i32) {
    %c0_i32 = arith.constant 0 : i32
    %c0_i32_0 = arith.constant 0 : i32
    %c0_i32_1 = arith.constant 0 : i32
    return %arg1, %c0_i32, %c0_i32_0 : i32, i32, i32
  }
  func.func @transform_9(%arg0: i32, %arg1: i32) -> (i32, i32, i32) {
    %c2_i32 = arith.constant 2 : i32
    %0 = arith.muli %arg1, %c2_i32 : i32
    %1 = arith.addi %0, %arg0 : i32
    %c0_i32 = arith.constant 0 : i32
    %c0_i32_0 = arith.constant 0 : i32
    %c0_i32_1 = arith.constant 0 : i32
    return %1, %c0_i32, %c0_i32_0 : i32, i32, i32
  }
  func.func @transform_10(%arg0: i32, %arg1: i32) -> (i32, i32, i32, i32) {
    %c2_i32 = arith.constant 2 : i32
    %0 = arith.muli %arg1, %c2_i32 : i32
    %1 = arith.addi %0, %arg0 : i32
    %c0_i32 = arith.constant 0 : i32
    %c0_i32_0 = arith.constant 0 : i32
    %c0_i32_1 = arith.constant 0 : i32
    %c0_i32_2 = arith.constant 0 : i32
    return %1, %c0_i32, %c0_i32_0, %c0_i32_1 : i32, i32, i32, i32
  }
}

</mosaic_0001>

<llo_original>
// kernel: _encoder_forward.1
$region0: #{_encoder_forward.1}
  #allocation0 [shape = 'u32[]', space=smem, size = 0x4, offset = 0x4, fixed_abs, tag = 'smem constant byte address 0x4 - core index']
  #allocation1 [shape = 'u32[144,128]{1,0:T(1,128)}', space=vmem, size = 0x12000, scoped, tag = 'internal scratch']
  #allocation2 [shape = 'f32[8,32]{1,0:T(8,128)}', space=vmem, size = 0x1000, scoped, tag = 'scratch operand']
  %s0 = inlined_call_operand.vmem [shape: f32[2,8,32], index: 0, kind: input, shape index: {}]
  %s1 = inlined_call_operand.vmem [shape: f32[2,32,96], index: 1, kind: input, shape index: {}]
  %s2 = inlined_call_operand.vmem [shape: f32[2,1,96], index: 2, kind: input, shape index: {}]
  %s3 = inlined_call_operand.vmem [shape: f32[4,4,8,8], index: 3, kind: input, shape index: {}]
  %s4 = inlined_call_operand.vmem [shape: f32[2,8,8], index: 4, kind: input, shape index: {}]
  %s5 = inlined_call_operand.vmem [shape: f32[2,32,32], index: 5, kind: input, shape index: {}]
  %s6 = inlined_call_operand.vmem [shape: f32[2,1,32], index: 6, kind: input, shape index: {}]
  %s7 = inlined_call_operand.vmem [shape: f32[2,1,32], index: 7, kind: input, shape index: {}]
  %s8 = inlined_call_operand.vmem [shape: f32[2,1,32], index: 8, kind: input, shape index: {}]
  %s9 = inlined_call_operand.hbm [shape: f32[4,8,32], index: 9, kind: output, shape index: {0}]
  %s10 = inlined_call_operand.hbm [shape: f32[4,4,8,8], index: 10, kind: output, shape index: {1}]
  %11 = xla_tuple %s9, %s10
  %s12 = sld [smem:[#allocation0]]
  $region81: #{_encoder_forward.1} parent=0
    _
  %s14 = ssub.s32 1, %s12
  %s15 = scalar_select 0, %s14, %s12
  $region1: #{_encoder_forward.1} parent=0
    #allocation3 [shape = 'u8[8192]{0}', space=vmem, size = 0x2000, scoped, tag = 'output window, operand 0']
    #allocation4 [shape = 's32[2]{0}', space=sflag, size = 0x8, scoped, tag = 'scoped memory for _encoder_forward.1']
    #allocation5 [shape = 'u8[32768]{0}', space=vmem, size = 0x8000, scoped, tag = 'output window, operand 1']
    #allocation6 [shape = 's32[2]{0}', space=sflag, size = 0x8, scoped, tag = 'scoped memory for _encoder_forward.1']
    %16 = vsyncpa [#allocation4], 0
    %s17 = scalar_lea.sflag [#allocation4], 1
    %18 = vsyncpa %s17, 0
    %19 = vsyncpa [#allocation6], 0
    %s20 = scalar_lea.sflag [#allocation6], 1
    %21 = vsyncpa %s20, 0
    loop: start=0, step=1, limit=6
    $region2: #{_encoder_forward.1} parent=1 // loop_pre_header
      _
    $region3: #{_encoder_forward.1} parent=1 // loop_header
      %s23 = sphi 0, %s27
      %p24 = scmp.ge.s32.totalorder %s23, 6
      %s30 = sphi 0, %s42
      %s31 = sphi 0, %s38
      %s32 = sphi 0, %s30
      %s33 = sphi 0, %s31
      %s34 = sphi 0, %s32
      %s35 = sphi 0, %s33
      %s45 = sphi 0, %s47
      %s48 = sphi 0, %s45
      %s49 = sphi 0, %s48
      %s65 = sphi 0, %s49
      %s71 = sphi 0, %s73
      %s74 = sphi 0, %s71
      %s75 = sphi 0, %s74
      %s91 = sphi 0, %s75
      %s97 = sphi 0, %s99
      %s100 = sphi 0, %s97
      %s101 = sphi 0, %s100
      %s117 = sphi 0, %s101
      %s127 = sphi 0, %s129
      %s130 = sphi 0, %s127
      %s131 = sphi 0, %s130
      %s147 = sphi 0, %s131
      %s153 = sphi 0, %s155
      %s156 = sphi 0, %s153
      %s157 = sphi 0, %s156
      %s173 = sphi 0, %s157
      %s179 = sphi 0, %s181
      %s182 = sphi 0, %s179
      %s183 = sphi 0, %s182
      %s199 = sphi 0, %s183
      %s205 = sphi 0, %s207
      %s208 = sphi 0, %s205
      %s209 = sphi 0, %s208
      %s225 = sphi 0, %s209
      %s231 = sphi 0, %s233
      %s234 = sphi 0, %s231
      %s235 = sphi 0, %s234
      %s251 = sphi 0, %s235
      %s257 = sphi 0, %s259
      %s260 = sphi 0, %s257
      %s261 = sphi 0, %s260
      %s277 = sphi 0, %s261
      %s287 = sphi 0, %s289
      %s290 = sphi 0, %s287
      %s291 = sphi 0, %s290
      %s307 = sphi 0, %s291
      %s317 = sphi 0, %s319
      %s320 = sphi 0, %s317
      %s321 = sphi 0, %s320
      %s337 = sphi 0, %s321
    $region4: #{_encoder_forward.1} parent=1 // loop_header_branch
      %26 = sbr.rel (%p24) target = $region8
    $region5: #{_encoder_forward.1} parent=1 // loop_body
      %s28 = ssub.s32 %s23, 1
      %s29 = ssub.s32 %s23, 2
      %s36 = sadd.s32 1, %s31
      %p37 = scmp.ge.s32.totalorder %s36, 2
      %s38 = scalar_select %p37, 0, %s36
      %s39 = sadd.s32 1, %s30
      %s40 = scalar_select %p37, %s39, %s30
      %p41 = scmp.ge.s32.totalorder %s40, 2
      %s42 = scalar_select %p41, 0, %s40
      %s43 = ssub.s32 %s30, %s42
      %p44 = scmp.eq.s32.totalorder %s43, 0
      %s46 = sadd.s32 %s45, 1
      %s47 = scalar_select %p44, %s45, %s46
      %p50 = pneg %p44
      %p51 = scmp.eq.s32.totalorder %s23, 3
      %p52 = por %p50, %p51
      %p53 = scmp.ne.s32.totalorder %s45, %s48
      %p54 = scmp.eq.s32.totalorder %s23, 0
      %p55 = por %p53, %p54
      %p56 = scmp.ne.s32.totalorder %s45, %s48
      %p57 = scmp.eq.s32.totalorder %s28, 3
      %p58 = por %p56, %p57
      %p59 = scmp.ne.s32.totalorder %s48, %s49
      %p60 = scmp.eq.s32.totalorder %s28, 0
      %p61 = por %p59, %p60
      %p62 = scmp.ne.s32.totalorder %s48, %s49
      %p63 = scmp.eq.s32.totalorder %s29, 3
      %p64 = por %p62, %p63
      %p66 = scmp.ne.s32.totalorder %s49, %s65
      %p67 = scmp.eq.s32.totalorder %s29, 0
      %p68 = por %p66, %p67
      %s69 = ssub.s32 %s31, %s38
      %p70 = scmp.eq.s32.totalorder %s69, 0
      %s72 = sadd.s32 %s71, 1
      %s73 = scalar_select %p70, %s71, %s72
      %p76 = pneg %p70
      %p77 = scmp.eq.s32.totalorder %s23, 3
      %p78 = por %p76, %p77
      %p79 = scmp.ne.s32.totalorder %s71, %s74
      %p80 = scmp.eq.s32.totalorder %s23, 0
      %p81 = por %p79, %p80
      %p82 = scmp.ne.s32.totalorder %s71, %s74
      %p83 = scmp.eq.s32.totalorder %s28, 3
      %p84 = por %p82, %p83
      %p85 = scmp.ne.s32.totalorder %s74, %s75
      %p86 = scmp.eq.s32.totalorder %s28, 0
      %p87 = por %p85, %p86
      %p88 = scmp.ne.s32.totalorder %s74, %s75
      %p89 = scmp.eq.s32.totalorder %s29, 3
      %p90 = por %p88, %p89
      %p92 = scmp.ne.s32.totalorder %s75, %s91
      %p93 = scmp.eq.s32.totalorder %s29, 0
      %p94 = por %p92, %p93
      %s95 = ssub.s32 %s31, %s38
      %p96 = scmp.eq.s32.totalorder %s95, 0
      %s98 = sadd.s32 %s97, 1
      %s99 = scalar_select %p96, %s97, %s98
      %p102 = pneg %p96
      %p103 = scmp.eq.s32.totalorder %s23, 3
      %p104 = por %p102, %p103
      %p105 = scmp.ne.s32.totalorder %s97, %s100
      %p106 = scmp.eq.s32.totalorder %s23, 0
      %p107 = por %p105, %p106
      %p108 = scmp.ne.s32.totalorder %s97, %s100
      %p109 = scmp.eq.s32.totalorder %s28, 3
      %p110 = por %p108, %p109
      %p111 = scmp.ne.s32.totalorder %s100, %s101
      %p112 = scmp.eq.s32.totalorder %s28, 0
      %p113 = por %p111, %p112
      %p114 = scmp.ne.s32.totalorder %s100, %s101
      %p115 = scmp.eq.s32.totalorder %s29, 3
      %p116 = por %p114, %p115
      %p118 = scmp.ne.s32.totalorder %s101, %s117
      %p119 = scmp.eq.s32.totalorder %s29, 0
      %p120 = por %p118, %p119
      %s121 = smul.u32 %s31, 2
      %s122 = sadd.s32 %s121, %s30
      %s123 = smul.u32 %s38, 2
      %s124 = sadd.s32 %s123, %s42
      %s125 = ssub.s32 %s122, %s124
      %p126 = scmp.eq.s32.totalorder %s125, 0
      %s128 = sadd.s32 %s127, 1
      %s129 = scalar_select %p126, %s127, %s128
      %p132 = pneg %p126
      %p133 = scmp.eq.s32.totalorder %s23, 3
      %p134 = por %p132, %p133
      %p135 = scmp.ne.s32.totalorder %s127, %s130
      %p136 = scmp.eq.s32.totalorder %s23, 0
      %p137 = por %p135, %p136
      %p138 = scmp.ne.s32.totalorder %s127, %s130
      %p139 = scmp.eq.s32.totalorder %s28, 3
      %p140 = por %p138, %p139
      %p141 = scmp.ne.s32.totalorder %s130, %s131
      %p142 = scmp.eq.s32.totalorder %s28, 0
      %p143 = por %p141, %p142
      %p144 = scmp.ne.s32.totalorder %s130, %s131
      %p145 = scmp.eq.s32.totalorder %s29, 3
      %p146 = por %p144, %p145
      %p148 = scmp.ne.s32.totalorder %s131, %s147
      %p149 = scmp.eq.s32.totalorder %s29, 0
      %p150 = por %p148, %p149
      %s151 = ssub.s32 %s30, %s42
      %p152 = scmp.eq.s32.totalorder %s151, 0
      %s154 = sadd.s32 %s153, 1
      %s155 = scalar_select %p152, %s153, %s154
      %p158 = pneg %p152
      %p159 = scmp.eq.s32.totalorder %s23, 3
      %p160 = por %p158, %p159
      %p161 = scmp.ne.s32.totalorder %s153, %s156
      %p162 = scmp.eq.s32.totalorder %s23, 0
      %p163 = por %p161, %p162
      %p164 = scmp.ne.s32.totalorder %s153, %s156
      %p165 = scmp.eq.s32.totalorder %s28, 3
      %p166 = por %p164, %p165
      %p167 = scmp.ne.s32.totalorder %s156, %s157
      %p168 = scmp.eq.s32.totalorder %s28, 0
      %p169 = por %p167, %p168
      %p170 = scmp.ne.s32.totalorder %s156, %s157
      %p171 = scmp.eq.s32.totalorder %s29, 3
      %p172 = por %p170, %p171
      %p174 = scmp.ne.s32.totalorder %s157, %s173
      %p175 = scmp.eq.s32.totalorder %s29, 0
      %p176 = por %p174, %p175
      %s177 = ssub.s32 %s31, %s38
      %p178 = scmp.eq.s32.totalorder %s177, 0
      %s180 = sadd.s32 %s179, 1
      %s181 = scalar_select %p178, %s179, %s180
      %p184 = pneg %p178
      %p185 = scmp.eq.s32.totalorder %s23, 3
      %p186 = por %p184, %p185
      %p187 = scmp.ne.s32.totalorder %s179, %s182
      %p188 = scmp.eq.s32.totalorder %s23, 0
      %p189 = por %p187, %p188
      %p190 = scmp.ne.s32.totalorder %s179, %s182
      %p191 = scmp.eq.s32.totalorder %s28, 3
      %p192 = por %p190, %p191
      %p193 = scmp.ne.s32.totalorder %s182, %s183
      %p194 = scmp.eq.s32.totalorder %s28, 0
      %p195 = por %p193, %p194
      %p196 = scmp.ne.s32.totalorder %s182, %s183
      %p197 = scmp.eq.s32.totalorder %s29, 3
      %p198 = por %p196, %p197
      %p200 = scmp.ne.s32.totalorder %s183, %s199
      %p201 = scmp.eq.s32.totalorder %s29, 0
      %p202 = por %p200, %p201
      %s203 = ssub.s32 %s31, %s38
      %p204 = scmp.eq.s32.totalorder %s203, 0
      %s206 = sadd.s32 %s205, 1
      %s207 = scalar_select %p204, %s205, %s206
      %p210 = pneg %p204
      %p211 = scmp.eq.s32.totalorder %s23, 3
      %p212 = por %p210, %p211
      %p213 = scmp.ne.s32.totalorder %s205, %s208
      %p214 = scmp.eq.s32.totalorder %s23, 0
      %p215 = por %p213, %p214
      %p216 = scmp.ne.s32.totalorder %s205, %s208
      %p217 = scmp.eq.s32.totalorder %s28, 3
      %p218 = por %p216, %p217
      %p219 = scmp.ne.s32.totalorder %s208, %s209
      %p220 = scmp.eq.s32.totalorder %s28, 0
      %p221 = por %p219, %p220
      %p222 = scmp.ne.s32.totalorder %s208, %s209
      %p223 = scmp.eq.s32.totalorder %s29, 3
      %p224 = por %p222, %p223
      %p226 = scmp.ne.s32.totalorder %s209, %s225
      %p227 = scmp.eq.s32.totalorder %s29, 0
      %p228 = por %p226, %p227
      %s229 = ssub.s32 %s31, %s38
      %p230 = scmp.eq.s32.totalorder %s229, 0
      %s232 = sadd.s32 %s231, 1
      %s233 = scalar_select %p230, %s231, %s232
      %p236 = pneg %p230
      %p237 = scmp.eq.s32.totalorder %s23, 3
      %p238 = por %p236, %p237
      %p239 = scmp.ne.s32.totalorder %s231, %s234
      %p240 = scmp.eq.s32.totalorder %s23, 0
      %p241 = por %p239, %p240
      %p242 = scmp.ne.s32.totalorder %s231, %s234
      %p243 = scmp.eq.s32.totalorder %s28, 3
      %p244 = por %p242, %p243
      %p245 = scmp.ne.s32.totalorder %s234, %s235
      %p246 = scmp.eq.s32.totalorder %s28, 0
      %p247 = por %p245, %p246
      %p248 = scmp.ne.s32.totalorder %s234, %s235
      %p249 = scmp.eq.s32.totalorder %s29, 3
      %p250 = por %p248, %p249
      %p252 = scmp.ne.s32.totalorder %s235, %s251
      %p253 = scmp.eq.s32.totalorder %s29, 0
      %p254 = por %p252, %p253
      %s255 = ssub.s32 %s31, %s38
      %p256 = scmp.eq.s32.totalorder %s255, 0
      %s258 = sadd.s32 %s257, 1
      %s259 = scalar_select %p256, %s257, %s258
      %p262 = pneg %p256
      %p263 = scmp.eq.s32.totalorder %s23, 3
      %p264 = por %p262, %p263
      %p265 = scmp.ne.s32.totalorder %s257, %s260
      %p266 = scmp.eq.s32.totalorder %s23, 0
      %p267 = por %p265, %p266
      %p268 = scmp.ne.s32.totalorder %s257, %s260
      %p269 = scmp.eq.s32.totalorder %s28, 3
      %p270 = por %p268, %p269
      %p271 = scmp.ne.s32.totalorder %s260, %s261
      %p272 = scmp.eq.s32.totalorder %s28, 0
      %p273 = por %p271, %p272
      %p274 = scmp.ne.s32.totalorder %s260, %s261
      %p275 = scmp.eq.s32.totalorder %s29, 3
      %p276 = por %p274, %p275
      %p278 = scmp.ne.s32.totalorder %s261, %s277
      %p279 = scmp.eq.s32.totalorder %s29, 0
      %p280 = por %p278, %p279
      %s281 = smul.u32 %s31, 2
      %s282 = sadd.s32 %s281, %s30
      %s283 = smul.u32 %s38, 2
      %s284 = sadd.s32 %s283, %s42
      %s285 = ssub.s32 %s282, %s284
      %p286 = scmp.eq.s32.totalorder %s285, 0
      %s288 = sadd.s32 %s287, 1
      %s289 = scalar_select %p286, %s287, %s288
      %p292 = pneg %p286
      %p293 = scmp.eq.s32.totalorder %s23, 3
      %p294 = por %p292, %p293
      %p295 = scmp.ne.s32.totalorder %s287, %s290
      %p296 = scmp.eq.s32.totalorder %s23, 0
      %p297 = por %p295, %p296
      %p298 = scmp.ne.s32.totalorder %s287, %s290
      %p299 = scmp.eq.s32.totalorder %s28, 3
      %p300 = por %p298, %p299
      %p301 = scmp.ne.s32.totalorder %s290, %s291
      %p302 = scmp.eq.s32.totalorder %s28, 0
      %p303 = por %p301, %p302
      %p304 = scmp.ne.s32.totalorder %s290, %s291
      %p305 = scmp.eq.s32.totalorder %s29, 3
      %p306 = por %p304, %p305
      %p308 = scmp.ne.s32.totalorder %s291, %s307
      %p309 = scmp.eq.s32.totalorder %s29, 0
      %p310 = por %p308, %p309
      %s311 = smul.u32 %s31, 2
      %s312 = sadd.s32 %s311, %s30
      %s313 = smul.u32 %s38, 2
      %s314 = sadd.s32 %s313, %s42
      %s315 = ssub.s32 %s312, %s314
      %p316 = scmp.eq.s32.totalorder %s315, 0
      %s318 = sadd.s32 %s317, 1
      %s319 = scalar_select %p316, %s317, %s318
      %p322 = pneg %p316
      %p323 = scmp.eq.s32.totalorder %s23, 3
      %p324 = por %p322, %p323
      %p325 = scmp.ne.s32.totalorder %s317, %s320
      %p326 = scmp.eq.s32.totalorder %s23, 0
      %p327 = por %p325, %p326
      %p328 = scmp.ne.s32.totalorder %s317, %s320
      %p329 = scmp.eq.s32.totalorder %s28, 3
      %p330 = por %p328, %p329
      %p331 = scmp.ne.s32.totalorder %s320, %s321
      %p332 = scmp.eq.s32.totalorder %s28, 0
      %p333 = por %p331, %p332
      %p334 = scmp.ne.s32.totalorder %s320, %s321
      %p335 = scmp.eq.s32.totalorder %s29, 3
      %p336 = por %p334, %p335
      %p338 = scmp.ne.s32.totalorder %s321, %s337
      %p339 = scmp.eq.s32.totalorder %s29, 0
      %p340 = por %p338, %p339
      %p341 = scmp.le.s32.totalorder 1, %s23
      %p342 = scmp.lt.s32.totalorder %s23, 5
      %p343 = pnand %p341, %p342
      %p344 = pneg %p343
      // Predicated region
      $region9: #{_encoder_forward.1} parent=5 // pred_check
        _
      $region10: #{_encoder_forward.1} parent=5 // pred_check_branch
        %346 = sbr.rel (%p343) target = $region12
      $region11: #{_encoder_forward.1} parent=5 // pred_region
        %s347 = ssub.s32 %s23, 1
      $region12: #{_encoder_forward.1} parent=5 // pred_fallthru
        _
      %p348 = scmp.lt.s32.totalorder %s23, 4
      // Predicated region
      $region13: #{_encoder_forward.1} parent=5 // pred_check
        %p349 = pneg %p348
      $region14: #{_encoder_forward.1} parent=5 // pred_check_branch
        %351 = sbr.rel (%p349) target = $region16
      $region15: #{_encoder_forward.1} parent=5 // pred_region
        // Predicated region
        $region17: #{_encoder_forward.1} parent=15 // pred_check
          %p352 = pneg %p55
        $region18: #{_encoder_forward.1} parent=15 // pred_check_branch
          %354 = sbr.rel (%p352) target = $region20
        $region19: #{_encoder_forward.1} parent=15 // pred_region
          %p355 = scmp.lt.s32.totalorder %s30, 1
          %s356 = scalar_select %p355, %s30, 1
          %s357 = smul.addr %s356, 8
          %s358 = scalar_lea.vmem %s0, %s357
        $region20: #{_encoder_forward.1} parent=15 // pred_fallthru
          _
        // Predicated region
        $region21: #{_encoder_forward.1} parent=15 // pred_check
          %p359 = pneg %p81
        $region22: #{_encoder_forward.1} parent=15 // pred_check_branch
          %361 = sbr.rel (%p359) target = $region24
        $region23: #{_encoder_forward.1} parent=15 // pred_region
          %p362 = scmp.lt.s32.totalorder %s31, 1
          %s363 = scalar_select %p362, %s31, 1
          %s364 = smul.addr %s363, 4
          %s365 = smul.addr %s364, 8
          %s366 = scalar_lea.vmem %s1, %s365
        $region24: #{_encoder_forward.1} parent=15 // pred_fallthru
          _
        // Predicated region
        $region25: #{_encoder_forward.1} parent=15 // pred_check
          %p367 = pneg %p107
        $region26: #{_encoder_forward.1} parent=15 // pred_check_branch
          %369 = sbr.rel (%p367) target = $region28
        $region27: #{_encoder_forward.1} parent=15 // pred_region
          %p370 = scmp.lt.s32.totalorder %s31, 1
          %s371 = scalar_select %p370, %s31, 1
          %s372 = scalar_lea.vmem %s2, %s371
        $region28: #{_encoder_forward.1} parent=15 // pred_fallthru
          _
        // Predicated region
        $region29: #{_encoder_forward.1} parent=15 // pred_check
          %p373 = pneg %p137
        $region30: #{_encoder_forward.1} parent=15 // pred_check_branch
          %375 = sbr.rel (%p373) target = $region32
        $region31: #{_encoder_forward.1} parent=15 // pred_region
          %s376 = smul.u32 %s31, 2
          %s377 = sadd.s32 %s376, %s30
          %p378 = scmp.lt.s32.totalorder %s377, 3
          %s379 = scalar_select %p378, %s377, 3
          %s380 = smul.addr %s379, 4
          %s381 = smul.addr %s380, 8
          %s382 = scalar_lea.vmem %s3, %s381
          %s383 = smul.u32 %s31, 2
          %s384 = sadd.s32 %s383, %s30
        $region32: #{_encoder_forward.1} parent=15 // pred_fallthru
          _
        // Predicated region
        $region33: #{_encoder_forward.1} parent=15 // pred_check
          %p385 = pneg %p163
        $region34: #{_encoder_forward.1} parent=15 // pred_check_branch
          %387 = sbr.rel (%p385) target = $region36
        $region35: #{_encoder_forward.1} parent=15 // pred_region
          %p388 = scmp.lt.s32.totalorder %s30, 1
          %s389 = scalar_select %p388, %s30, 1
          %s390 = smul.addr %s389, 8
          %s391 = scalar_lea.vmem %s4, %s390
        $region36: #{_encoder_forward.1} parent=15 // pred_fallthru
          _
        // Predicated region
        $region37: #{_encoder_forward.1} parent=15 // pred_check
          %p392 = pneg %p189
        $region38: #{_encoder_forward.1} parent=15 // pred_check_branch
          %394 = sbr.rel (%p392) target = $region40
        $region39: #{_encoder_forward.1} parent=15 // pred_region
          %p395 = scmp.lt.s32.totalorder %s31, 1
          %s396 = scalar_select %p395, %s31, 1
          %s397 = smul.addr %s396, 4
          %s398 = smul.addr %s397, 8
          %s399 = scalar_lea.vmem %s5, %s398
        $region40: #{_encoder_forward.1} parent=15 // pred_fallthru
          _
        // Predicated region
        $region41: #{_encoder_forward.1} parent=15 // pred_check
          %p400 = pneg %p215
        $region42: #{_encoder_forward.1} parent=15 // pred_check_branch
          %402 = sbr.rel (%p400) target = $region44
        $region43: #{_encoder_forward.1} parent=15 // pred_region
          %p403 = scmp.lt.s32.totalorder %s31, 1
          %s404 = scalar_select %p403, %s31, 1
          %s405 = scalar_lea.vmem %s6, %s404
        $region44: #{_encoder_forward.1} parent=15 // pred_fallthru
          _
        // Predicated region
        $region45: #{_encoder_forward.1} parent=15 // pred_check
          %p406 = pneg %p241
        $region46: #{_encoder_forward.1} parent=15 // pred_check_branch
          %408 = sbr.rel (%p406) target = $region48
        $region47: #{_encoder_forward.1} parent=15 // pred_region
          %p409 = scmp.lt.s32.totalorder %s31, 1
          %s410 = scalar_select %p409, %s31, 1
          %s411 = scalar_lea.vmem %s7, %s410
        $region48: #{_encoder_forward.1} parent=15 // pred_fallthru
          _
        // Predicated region
        $region49: #{_encoder_forward.1} parent=15 // pred_check
          %p412 = pneg %p267
        $region50: #{_encoder_forward.1} parent=15 // pred_check_branch
          %414 = sbr.rel (%p412) target = $region52
        $region51: #{_encoder_forward.1} parent=15 // pred_region
          %p415 = scmp.lt.s32.totalorder %s31, 1
          %s416 = scalar_select %p415, %s31, 1
          %s417 = scalar_lea.vmem %s8, %s416
        $region52: #{_encoder_forward.1} parent=15 // pred_fallthru
          _
      $region16: #{_encoder_forward.1} parent=5 // pred_fallthru
        _
      %p418 = scmp.le.s32.totalorder 1, %s23
      %p419 = scmp.lt.s32.totalorder %s23, 5
      %p420 = pnand %p418, %p419
      %p421 = pneg %p420
      // Predicated region
      $region53: #{_encoder_forward.1} parent=5 // pred_check
        _
      $region54: #{_encoder_forward.1} parent=5 // pred_check_branch
        %423 = sbr.rel (%p420) target = $region56
      $region55: #{_encoder_forward.1} parent=5 // pred_region
        %s424 = ssub.s32 %s23, 1
        %p425 = scmp.lt.s32.totalorder %s32, 1
        %s426 = scalar_select %p425, %s32, 1
        %s427 = smul.addr %s426, 8
        %s428 = scalar_lea.vmem %s0, %s427
        %p429 = pneg %p61
        %p430 = pneg %p58
        %p431 = scmp.lt.s32.totalorder %s33, 1
        %s432 = scalar_select %p431, %s33, 1
        %s433 = smul.addr %s432, 4
        %s434 = smul.addr %s433, 8
        %s435 = scalar_lea.vmem %s1, %s434
        %p436 = pneg %p87
        %p437 = pneg %p84
        %p438 = scmp.lt.s32.totalorder %s33, 1
        %s439 = scalar_select %p438, %s33, 1
        %s440 = scalar_lea.vmem %s2, %s439
        %p441 = pneg %p113
        %p442 = pneg %p110
        %s443 = smul.u32 %s33, 2
        %s444 = sadd.s32 %s443, %s32
        %p445 = scmp.lt.s32.totalorder %s444, 3
        %s446 = scalar_select %p445, %s444, 3
        %s447 = smul.addr %s446, 4
        %s448 = smul.addr %s447, 8
        %s449 = scalar_lea.vmem %s3, %s448
        %p450 = pneg %p143
        %p451 = pneg %p140
        %p452 = scmp.lt.s32.totalorder %s32, 1
        %s453 = scalar_select %p452, %s32, 1
        %s454 = smul.addr %s453, 8
        %s455 = scalar_lea.vmem %s4, %s454
        %p456 = pneg %p169
        %p457 = pneg %p166
        %p458 = scmp.lt.s32.totalorder %s33, 1
        %s459 = scalar_select %p458, %s33, 1
        %s460 = smul.addr %s459, 4
        %s461 = smul.addr %s460, 8
        %s462 = scalar_lea.vmem %s5, %s461
        %p463 = pneg %p195
        %p464 = pneg %p192
        %p465 = scmp.lt.s32.totalorder %s33, 1
        %s466 = scalar_select %p465, %s33, 1
        %s467 = scalar_lea.vmem %s6, %s466
        %p468 = pneg %p221
        %p469 = pneg %p218
        %p470 = scmp.lt.s32.totalorder %s33, 1
        %s471 = scalar_select %p470, %s33, 1
        %s472 = scalar_lea.vmem %s7, %s471
        %p473 = pneg %p247
        %p474 = pneg %p244
        %p475 = scmp.lt.s32.totalorder %s33, 1
        %s476 = scalar_select %p475, %s33, 1
        %s477 = scalar_lea.vmem %s8, %s476
        %p478 = pneg %p273
        %p479 = pneg %p270
        %p480 = pneg %p303
        %p481 = pneg %p300
        %s482 = sand.u32 %s290, 1
        %s483 = scalar_lea.sflag [#allocation4], %s482
        %s484 = sand.u32 %s290, 1
        %s485 = smul.addr %s484, 8
        %s486 = scalar_lea.vmem [#allocation3], %s485
        %p487 = pneg %p333
        %p488 = pneg %p330
        %s489 = sand.u32 %s320, 1
        %s490 = scalar_lea.sflag [#allocation6], %s489
        %s491 = sand.u32 %s320, 1
        %s492 = smul.addr %s491, 32
        %s493 = scalar_lea.vmem [#allocation5], %s492
        %p494 = scmp.lt.s32.totalorder %s32, 1
        %s495 = scalar_select %p494, %s32, 1
        %s496 = smul.addr %s495, 8
        %s497 = scalar_lea.vmem %s0, %s496
        %p498 = scmp.lt.s32.totalorder %s33, 1
        %s499 = scalar_select %p498, %s33, 1
        %s500 = smul.addr %s499, 4
        %s501 = smul.addr %s500, 8
        %s502 = scalar_lea.vmem %s1, %s501
        %p503 = scmp.lt.s32.totalorder %s33, 1
        %s504 = scalar_select %p503, %s33, 1
        %s505 = scalar_lea.vmem %s2, %s504
        %s506 = smul.u32 %s33, 2
        %s507 = sadd.s32 %s506, %s32
        %p508 = scmp.lt.s32.totalorder %s507, 3
        %s509 = scalar_select %p508, %s507, 3
        %s510 = smul.addr %s509, 4
        %s511 = smul.addr %s510, 8
        %s512 = scalar_lea.vmem %s3, %s511
        %s513 = smul.u32 %s33, 2
        %s514 = sadd.s32 %s513, %s32
        %p515 = scmp.lt.s32.totalorder %s32, 1
        %s516 = scalar_select %p515, %s32, 1
        %s517 = smul.addr %s516, 8
        %s518 = scalar_lea.vmem %s4, %s517
        %p519 = scmp.lt.s32.totalorder %s33, 1
        %s520 = scalar_select %p519, %s33, 1
        %s521 = smul.addr %s520, 4
        %s522 = smul.addr %s521, 8
        %s523 = scalar_lea.vmem %s5, %s522
        %p524 = scmp.lt.s32.totalorder %s33, 1
        %s525 = scalar_select %p524, %s33, 1
        %s526 = scalar_lea.vmem %s6, %s525
        %p527 = scmp.lt.s32.totalorder %s33, 1
        %s528 = scalar_select %p527, %s33, 1
        %s529 = scalar_lea.vmem %s7, %s528
        %p530 = scmp.lt.s32.totalorder %s33, 1
        %s531 = scalar_select %p530, %s33, 1
        %s532 = scalar_lea.vmem %s8, %s531
        %s533 = smul.u32 %s33, 2
        %s534 = sadd.s32 %s533, %s32
        %s535 = smul.u32 %s33, 2
        %s536 = sadd.s32 %s535, %s32
        %p537 = scmp.eq.s32.totalorder %s33, 0
        // Predicated region
        $region57: #{_encoder_forward.1} parent=55 // pred_check
          %p538 = pneg %p537
        $region58: #{_encoder_forward.1} parent=55 // pred_check_branch
          %540 = sbr.rel (%p538) target = $region60
        $region59: #{_encoder_forward.1} parent=55 // pred_region
          %v541 = vld [vmem:[%s497] sm:$0xff]
          %vm542 = vcmask 261120
          %543 = vst.msk [vmem:[#allocation2] sm:$0xff] %vm542, %v541
        $region60: #{_encoder_forward.1} parent=55 // pred_fallthru
          _
        %v544 = vld [vmem:[#allocation2] sm:$0xff]
        %v545 = vld [vmem:[%s502] sm:$0xff]
        %v546 = vld [vmem:[%s502 + $0x8] sm:$0xff]
        %v547 = vld [vmem:[%s502 + $0x10] sm:$0xff]
        %v548 = vld [vmem:[%s502 + $0x18] sm:$0xff]
        %v549 = vld [vmem:[%s505] sm:$0x1]
        %v551 = vlaneseq
        %v552 = vshrl.u32 %v551, 7
        %v553 = vsub.s32 0, %v552
        %v554 = vrot.slane %v549, %v553
        %vm556 = vcmask 261120
        %v558 = vsel %vm556, %v544, 0
        %560 = vmatprep.subr.mxu0 0.0
        %561 = vmatpush1.msra.mxu0 %v545
        %562 = vmatprep.subr.mxu0 0.0
        %563 = vmatpush1.msra.mxu0 %v546
        %564 = vmatprep.subr.mxu0 0.0
        %565 = vmatpush1.msra.mxu0 %v547
        %566 = vmatprep.subr.mxu0 0.0
        %567 = vmatpush1.msra.mxu0 %v548
        %568 = vmatprep.subr.mxu0 0.0
        %569 = vmatpush1.msra.mxu0 0.0
        %570 = vmatprep.subr.mxu0 0.0
        %571 = vmatpush1.msra.mxu0 0.0
        %572 = vmatprep.subr.mxu0 0.0
        %573 = vmatpush1.msra.mxu0 0.0
        %574 = vmatprep.subr.mxu0 0.0
        %575 = vmatpush1.msra.mxu0 0.0
        %576 = vmatprep.subr.mxu0 0.0
        %577 = vmatpush1.msra.mxu0 0.0
        %578 = vmatprep.subr.mxu0 0.0
        %579 = vmatpush1.msra.mxu0 0.0
        %580 = vmatprep.subr.mxu0 0.0
        %581 = vmatpush1.msra.mxu0 0.0
        %582 = vmatprep.subr.mxu0 0.0
        %583 = vmatpush1.msra.mxu0 0.0
        %584 = vmatprep.subr.mxu0 0.0
        %585 = vmatpush1.msra.mxu0 0.0
        %586 = vmatprep.subr.mxu0 0.0
        %587 = vmatpush1.msra.mxu0 0.0
        %588 = vmatprep.subr.mxu0 0.0
        %589 = vmatpush1.msra.mxu0 0.0
        %590 = vmatprep.subr.mxu0 0.0
        %591 = vmatpush1.msra.mxu0 0.0
        %592 = vmatprep.subr.mxu0 0.0
        %593 = vmatpush1.msra.mxu0 0.0
        %594 = vmatprep.subr.mxu0 0.0
        %595 = vmatpush1.msra.mxu0 0.0
        %596 = vmatprep.subr.mxu0 0.0
        %597 = vmatpush1.msra.mxu0 0.0
        %598 = vmatprep.subr.mxu0 0.0
        %599 = vmatpush1.msra.mxu0 0.0
        %600 = vmatprep.subr.mxu0 0.0
        %601 = vmatpush1.msra.mxu0 0.0
        %602 = vmatprep.subr.mxu0 0.0
        %603 = vmatpush1.msra.mxu0 0.0
        %604 = vmatprep.subr.mxu0 0.0
        %605 = vmatpush1.msra.mxu0 0.0
        %606 = vmatprep.subr.mxu0 0.0
        %607 = vmatpush1.msra.mxu0 0.0
        %608 = vmatprep.subr.mxu0 0.0
        %609 = vmatpush1.msra.mxu0 0.0
        %610 = vmatprep.subr.mxu0 0.0
        %611 = vmatpush1.msra.mxu0 0.0
        %612 = vmatprep.subr.mxu0 0.0
        %613 = vmatpush1.msra.mxu0 0.0
        %614 = vmatprep.subr.mxu0 0.0
        %615 = vmatpush1.msra.mxu0 0.0
        %616 = vmatprep.subr.mxu0 0.0
        %617 = vmatpush1.msra.mxu0 0.0
        %618 = vmatprep.subr.mxu0 0.0
        %619 = vmatpush1.msra.mxu0 0.0
        %620 = vmatprep.subr.mxu0 0.0
        %621 = vmatpush1.msra.mxu0 0.0
        %622 = vmatprep.subr.mxu0 0.0
        %623 = vmatpush1.msra.mxu0 0.0
        %624 = vmatprep.mubr.f32.mxu0 0.0
        %625 = vmatmul.mubr.f32.gmra.mrb[0].mxu0 %v558
        %v626 = vpop.f32.mrb[0].mxu0
        %v627 = vadd.f32 %v554, %v626
        %v628 = vpop.f32.mrb[0].mxu0
        %629 = vdwg.mxu0
        %v630 = vld [vmem:[%s518] sm:$0xff]
        %v631 = vld [vmem:[%s512] sm:$0xff]
        %v632 = vld [vmem:[%s512 + $0x8] sm:$0xff]
        %v633 = vld [vmem:[%s512 + $0x10] sm:$0xff]
        %v634 = vld [vmem:[%s512 + $0x18] sm:$0xff]
        %v635 = vld [vmem:[%s523] sm:$0xff]
        %v636 = vld [vmem:[%s523 + $0x8] sm:$0xff]
        %v637 = vld [vmem:[%s523 + $0x10] sm:$0xff]
        %v638 = vld [vmem:[%s523 + $0x18] sm:$0xff]
        %640 = vrot.lane.b32.xlu0 %v627, 96
        %v641 = vpop.permute.xlu0 %640
        %vm642 = vcmask 64512
        %v643 = vsel %vm642, %v627, 0
        %v645 = vsel %vm642, %v641, 0
        %647 = vmatprep.subr.mxu0 0.0
        %648 = vmatpush1.xpose.msra.mxu0 %v645
        %649 = vmatprep.subr.mxu0 0.0
        %650 = vmatpush1.xpose.msra.mxu0 0.0
        %651 = vmatprep.subr.mxu0 0.0
        %652 = vmatpush1.xpose.msra.mxu0 0.0
        %653 = vmatprep.subr.mxu0 0.0
        %654 = vmatpush1.xpose.msra.mxu0 0.0
        %655 = vmatprep.subr.mxu0 0.0
        %656 = vmatpush1.xpose.msra.mxu0 0.0
        %657 = vmatprep.subr.mxu0 0.0
        %658 = vmatpush1.xpose.msra.mxu0 0.0
        %659 = vmatprep.subr.mxu0 0.0
        %660 = vmatpush1.xpose.msra.mxu0 0.0
        %661 = vmatprep.subr.mxu0 0.0
        %662 = vmatpush1.xpose.msra.mxu0 0.0
        %663 = vmatprep.subr.mxu0 0.0
        %664 = vmatpush1.xpose.msra.mxu0 0.0
        %665 = vmatprep.subr.mxu0 0.0
        %666 = vmatpush1.xpose.msra.mxu0 0.0
        %667 = vmatprep.subr.mxu0 0.0
        %668 = vmatpush1.xpose.msra.mxu0 0.0
        %669 = vmatprep.subr.mxu0 0.0
        %670 = vmatpush1.xpose.msra.mxu0 0.0
        %671 = vmatprep.subr.mxu0 0.0
        %672 = vmatpush1.xpose.msra.mxu0 0.0
        %673 = vmatprep.subr.mxu0 0.0
        %674 = vmatpush1.xpose.msra.mxu0 0.0
        %675 = vmatprep.subr.mxu0 0.0
        %676 = vmatpush1.xpose.msra.mxu0 0.0
        %677 = vmatprep.subr.mxu0 0.0
        %678 = vmatpush1.xpose.msra.mxu0 0.0
        %679 = vmatprep.subr.mxu0 0.0
        %680 = vmatpush1.xpose.msra.mxu0 0.0
        %681 = vmatprep.subr.mxu0 0.0
        %682 = vmatpush1.xpose.msra.mxu0 0.0
        %683 = vmatprep.subr.mxu0 0.0
        %684 = vmatpush1.xpose.msra.mxu0 0.0
        %685 = vmatprep.subr.mxu0 0.0
        %686 = vmatpush1.xpose.msra.mxu0 0.0
        %687 = vmatprep.subr.mxu0 0.0
        %688 = vmatpush1.xpose.msra.mxu0 0.0
        %689 = vmatprep.subr.mxu0 0.0
        %690 = vmatpush1.xpose.msra.mxu0 0.0
        %691 = vmatprep.subr.mxu0 0.0
        %692 = vmatpush1.xpose.msra.mxu0 0.0
        %693 = vmatprep.subr.mxu0 0.0
        %694 = vmatpush1.xpose.msra.mxu0 0.0
        %695 = vmatprep.subr.mxu0 0.0
        %696 = vmatpush1.xpose.msra.mxu0 0.0
        %697 = vmatprep.subr.mxu0 0.0
        %698 = vmatpush1.xpose.msra.mxu0 0.0
        %699 = vmatprep.subr.mxu0 0.0
        %700 = vmatpush1.xpose.msra.mxu0 0.0
        %701 = vmatprep.subr.mxu0 0.0
        %702 = vmatpush1.xpose.msra.mxu0 0.0
        %703 = vmatprep.subr.mxu0 0.0
        %704 = vmatpush1.xpose.msra.mxu0 0.0
        %705 = vmatprep.subr.mxu0 0.0
        %706 = vmatpush1.xpose.msra.mxu0 0.0
        %707 = vmatprep.subr.mxu0 0.0
        %708 = vmatpush1.xpose.msra.mxu0 0.0
        %709 = vmatprep.subr.mxu0 0.0
        %710 = vmatpush1.xpose.msra.mxu0 0.0
        %711 = vmatprep.mubr.f32.mxu0 0.0
        %712 = vmatmul.mubr.f32.gmra.mrb[0].mxu0 %v643
        %v713 = vpop.f32.mrb[0].mxu0
        %v714 = vadd.f32 %v631, %v713
        %v715 = vpop.f32.mrb[0].mxu0
        %716 = vdwg.mxu0
        %v717 = vsel %vm642, %v714, -inf
        %718 = vmax.xlane.f32.xlu0 %v717
        %v719 = vpop.xlane.xlu0 %718
        %v720 = vsub.f32 %v714, %v719
        %v721 = vmul.f32 %v720, 1.442695
        %v722 = vpow.pop %v721
        %v723 = vmul.f32 %v722, %v630
        %v724 = vsel %vm642, %v723, 0.0
        %725 = vadd.xlane.f32.xlu0 %v724
        %v726 = vpop.xlane.xlu0 %725
        %v727 = vmax.f32 %v726, 1e-09
        %v728 = vrcp.pop %v727
        %v729 = vmul.f32 %v723, %v728
        %730 = vst.msk [vmem:[%s493] sm:$0xff] %vm642, %v729
        %731 = vrot.lane.b32.xlu0 %v627, 64
        %v732 = vpop.permute.xlu0 %731
        %v735 = vsel %vm642, %v729, 0
        %737 = vmatprep.subr.mxu0 0.0
        %738 = vmatpush1.msra.mxu0 %v732
        %739 = vmatprep.subr.mxu0 0.0
        %740 = vmatpush1.msra.mxu0 0.0
        %741 = vmatprep.subr.mxu0 0.0
        %742 = vmatpush1.msra.mxu0 0.0
        %743 = vmatprep.subr.mxu0 0.0
        %744 = vmatpush1.msra.mxu0 0.0
        %745 = vmatprep.subr.mxu0 0.0
        %746 = vmatpush1.msra.mxu0 0.0
        %747 = vmatprep.subr.mxu0 0.0
        %748 = vmatpush1.msra.mxu0 0.0
        %749 = vmatprep.subr.mxu0 0.0
        %750 = vmatpush1.msra.mxu0 0.0
        %751 = vmatprep.subr.mxu0 0.0
        %752 = vmatpush1.msra.mxu0 0.0
        %753 = vmatprep.subr.mxu0 0.0
        %754 = vmatpush1.msra.mxu0 0.0
        %755 = vmatprep.subr.mxu0 0.0
        %756 = vmatpush1.msra.mxu0 0.0
        %757 = vmatprep.subr.mxu0 0.0
        %758 = vmatpush1.msra.mxu0 0.0
        %759 = vmatprep.subr.mxu0 0.0
        %760 = vmatpush1.msra.mxu0 0.0
        %761 = vmatprep.subr.mxu0 0.0
        %762 = vmatpush1.msra.mxu0 0.0
        %763 = vmatprep.subr.mxu0 0.0
        %764 = vmatpush1.msra.mxu0 0.0
        %765 = vmatprep.subr.mxu0 0.0
        %766 = vmatpush1.msra.mxu0 0.0
        %767 = vmatprep.subr.mxu0 0.0
        %768 = vmatpush1.msra.mxu0 0.0
        %769 = vmatprep.subr.mxu0 0.0
        %770 = vmatpush1.msra.mxu0 0.0
        %771 = vmatprep.subr.mxu0 0.0
        %772 = vmatpush1.msra.mxu0 0.0
        %773 = vmatprep.subr.mxu0 0.0
        %774 = vmatpush1.msra.mxu0 0.0
        %775 = vmatprep.subr.mxu0 0.0
        %776 = vmatpush1.msra.mxu0 0.0
        %777 = vmatprep.subr.mxu0 0.0
        %778 = vmatpush1.msra.mxu0 0.0
        %779 = vmatprep.subr.mxu0 0.0
        %780 = vmatpush1.msra.mxu0 0.0
        %781 = vmatprep.subr.mxu0 0.0
        %782 = vmatpush1.msra.mxu0 0.0
        %783 = vmatprep.subr.mxu0 0.0
        %784 = vmatpush1.msra.mxu0 0.0
        %785 = vmatprep.subr.mxu0 0.0
        %786 = vmatpush1.msra.mxu0 0.0
        %787 = vmatprep.subr.mxu0 0.0
        %788 = vmatpush1.msra.mxu0 0.0
        %789 = vmatprep.subr.mxu0 0.0
        %790 = vmatpush1.msra.mxu0 0.0
        %791 = vmatprep.subr.mxu0 0.0
        %792 = vmatpush1.msra.mxu0 0.0
        %793 = vmatprep.subr.mxu0 0.0
        %794 = vmatpush1.msra.mxu0 0.0
        %795 = vmatprep.subr.mxu0 0.0
        %796 = vmatpush1.msra.mxu0 0.0
        %797 = vmatprep.subr.mxu0 0.0
        %798 = vmatpush1.msra.mxu0 0.0
        %799 = vmatprep.subr.mxu0 0.0
        %800 = vmatpush1.msra.mxu0 0.0
        %801 = vmatprep.mubr.f32.mxu0 0.0
        %802 = vmatmul.mubr.f32.gmra.mrb[0].mxu0 %v735
        %v803 = vpop.f32.mrb[0].mxu0
        %v804 = vadd.f32 0.0, %v803
        %v805 = vpop.f32.mrb[0].mxu0
        %806 = vdwg.mxu0
        %807 = vrot.lane.b32.xlu0 %v627, 120
        %v808 = vpop.permute.xlu0 %807
        %809 = vrot.lane.b32.xlu0 %v627, 88
        %v810 = vpop.permute.xlu0 %809
        %v811 = vsel %vm642, %v808, 0
        %v813 = vsel %vm642, %v810, 0
        %815 = vmatprep.subr.mxu0 0.0
        %816 = vmatpush1.xpose.msra.mxu0 %v813
        %817 = vmatprep.subr.mxu0 0.0
        %818 = vmatpush1.xpose.msra.mxu0 0.0
        %819 = vmatprep.subr.mxu0 0.0
        %820 = vmatpush1.xpose.msra.mxu0 0.0
        %821 = vmatprep.subr.mxu0 0.0
        %822 = vmatpush1.xpose.msra.mxu0 0.0
        %823 = vmatprep.subr.mxu0 0.0
        %824 = vmatpush1.xpose.msra.mxu0 0.0
        %825 = vmatprep.subr.mxu0 0.0
        %826 = vmatpush1.xpose.msra.mxu0 0.0
        %827 = vmatprep.subr.mxu0 0.0
        %828 = vmatpush1.xpose.msra.mxu0 0.0
        %829 = vmatprep.subr.mxu0 0.0
        %830 = vmatpush1.xpose.msra.mxu0 0.0
        %831 = vmatprep.subr.mxu0 0.0
        %832 = vmatpush1.xpose.msra.mxu0 0.0
        %833 = vmatprep.subr.mxu0 0.0
        %834 = vmatpush1.xpose.msra.mxu0 0.0
        %835 = vmatprep.subr.mxu0 0.0
        %836 = vmatpush1.xpose.msra.mxu0 0.0
        %837 = vmatprep.subr.mxu0 0.0
        %838 = vmatpush1.xpose.msra.mxu0 0.0
        %839 = vmatprep.subr.mxu0 0.0
        %840 = vmatpush1.xpose.msra.mxu0 0.0
        %841 = vmatprep.subr.mxu0 0.0
        %842 = vmatpush1.xpose.msra.mxu0 0.0
        %843 = vmatprep.subr.mxu0 0.0
        %844 = vmatpush1.xpose.msra.mxu0 0.0
        %845 = vmatprep.subr.mxu0 0.0
        %846 = vmatpush1.xpose.msra.mxu0 0.0
        %847 = vmatprep.subr.mxu0 0.0
        %848 = vmatpush1.xpose.msra.mxu0 0.0
        %849 = vmatprep.subr.mxu0 0.0
        %850 = vmatpush1.xpose.msra.mxu0 0.0
        %851 = vmatprep.subr.mxu0 0.0
        %852 = vmatpush1.xpose.msra.mxu0 0.0
        %853 = vmatprep.subr.mxu0 0.0
        %854 = vmatpush1.xpose.msra.mxu0 0.0
        %855 = vmatprep.subr.mxu0 0.0
        %856 = vmatpush1.xpose.msra.mxu0 0.0
        %857 = vmatprep.subr.mxu0 0.0
        %858 = vmatpush1.xpose.msra.mxu0 0.0
        %859 = vmatprep.subr.mxu0 0.0
        %860 = vmatpush1.xpose.msra.mxu0 0.0
        %861 = vmatprep.subr.mxu0 0.0
        %862 = vmatpush1.xpose.msra.mxu0 0.0
        %863 = vmatprep.subr.mxu0 0.0
        %864 = vmatpush1.xpose.msra.mxu0 0.0
        %865 = vmatprep.subr.mxu0 0.0
        %866 = vmatpush1.xpose.msra.mxu0 0.0
        %867 = vmatprep.subr.mxu0 0.0
        %868 = vmatpush1.xpose.msra.mxu0 0.0
        %869 = vmatprep.subr.mxu0 0.0
        %870 = vmatpush1.xpose.msra.mxu0 0.0
        %871 = vmatprep.subr.mxu0 0.0
        %872 = vmatpush1.xpose.msra.mxu0 0.0
        %873 = vmatprep.subr.mxu0 0.0
        %874 = vmatpush1.xpose.msra.mxu0 0.0
        %875 = vmatprep.subr.mxu0 0.0
        %876 = vmatpush1.xpose.msra.mxu0 0.0
        %877 = vmatprep.subr.mxu0 0.0
        %878 = vmatpush1.xpose.msra.mxu0 0.0
        %879 = vmatprep.mubr.f32.mxu0 0.0
        %880 = vmatmul.mubr.f32.gmra.mrb[0].mxu0 %v811
        %v881 = vpop.f32.mrb[0].mxu0
        %v882 = vadd.f32 %v632, %v881
        %v883 = vpop.f32.mrb[0].mxu0
        %884 = vdwg.mxu0
        %v885 = vsel %vm642, %v882, -inf
        %886 = vmax.xlane.f32.xlu0 %v885
        %v887 = vpop.xlane.xlu0 %886
        %v888 = vsub.f32 %v882, %v887
        %v889 = vmul.f32 %v888, 1.442695
        %v890 = vpow.pop %v889
        %v891 = vmul.f32 %v890, %v630
        %v892 = vsel %vm642, %v891, 0.0
        %893 = vadd.xlane.f32.xlu0 %v892
        %v894 = vpop.xlane.xlu0 %893
        %v895 = vmax.f32 %v894, 1e-09
        %v896 = vrcp.pop %v895
        %v897 = vmul.f32 %v891, %v896
        %s898 = scalar_lea.vmem %s493, 8 [#allocation5]
        %899 = vst.msk [vmem:[%s898] sm:$0xff] %vm642, %v897
        %900 = vrot.lane.b32.xlu0 %v627, 56
        %v901 = vpop.permute.xlu0 %900
        %v904 = vsel %vm642, %v897, 0
        %906 = vmatprep.subr.mxu0 0.0
        %907 = vmatpush1.msra.mxu0 %v901
        %908 = vmatprep.subr.mxu0 0.0
        %909 = vmatpush1.msra.mxu0 0.0
        %910 = vmatprep.subr.mxu0 0.0
        %911 = vmatpush1.msra.mxu0 0.0
        %912 = vmatprep.subr.mxu0 0.0
        %913 = vmatpush1.msra.mxu0 0.0
        %914 = vmatprep.subr.mxu0 0.0
        %915 = vmatpush1.msra.mxu0 0.0
        %916 = vmatprep.subr.mxu0 0.0
        %917 = vmatpush1.msra.mxu0 0.0
        %918 = vmatprep.subr.mxu0 0.0
        %919 = vmatpush1.msra.mxu0 0.0
        %920 = vmatprep.subr.mxu0 0.0
        %921 = vmatpush1.msra.mxu0 0.0
        %922 = vmatprep.subr.mxu0 0.0
        %923 = vmatpush1.msra.mxu0 0.0
        %924 = vmatprep.subr.mxu0 0.0
        %925 = vmatpush1.msra.mxu0 0.0
        %926 = vmatprep.subr.mxu0 0.0
        %927 = vmatpush1.msra.mxu0 0.0
        %928 = vmatprep.subr.mxu0 0.0
        %929 = vmatpush1.msra.mxu0 0.0
        %930 = vmatprep.subr.mxu0 0.0
        %931 = vmatpush1.msra.mxu0 0.0
        %932 = vmatprep.subr.mxu0 0.0
        %933 = vmatpush1.msra.mxu0 0.0
        %934 = vmatprep.subr.mxu0 0.0
        %935 = vmatpush1.msra.mxu0 0.0
        %936 = vmatprep.subr.mxu0 0.0
        %937 = vmatpush1.msra.mxu0 0.0
        %938 = vmatprep.subr.mxu0 0.0
        %939 = vmatpush1.msra.mxu0 0.0
        %940 = vmatprep.subr.mxu0 0.0
        %941 = vmatpush1.msra.mxu0 0.0
        %942 = vmatprep.subr.mxu0 0.0
        %943 = vmatpush1.msra.mxu0 0.0
        %944 = vmatprep.subr.mxu0 0.0
        %945 = vmatpush1.msra.mxu0 0.0
        %946 = vmatprep.subr.mxu0 0.0
        %947 = vmatpush1.msra.mxu0 0.0
        %948 = vmatprep.subr.mxu0 0.0
        %949 = vmatpush1.msra.mxu0 0.0
        %950 = vmatprep.subr.mxu0 0.0
        %951 = vmatpush1.msra.mxu0 0.0
        %952 = vmatprep.subr.mxu0 0.0
        %953 = vmatpush1.msra.mxu0 0.0
        %954 = vmatprep.subr.mxu0 0.0
        %955 = vmatpush1.msra.mxu0 0.0
        %956 = vmatprep.subr.mxu0 0.0
        %957 = vmatpush1.msra.mxu0 0.0
        %958 = vmatprep.subr.mxu0 0.0
        %959 = vmatpush1.msra.mxu0 0.0
        %960 = vmatprep.subr.mxu0 0.0
        %961 = vmatpush1.msra.mxu0 0.0
        %962 = vmatprep.subr.mxu0 0.0
        %963 = vmatpush1.msra.mxu0 0.0
        %964 = vmatprep.subr.mxu0 0.0
        %965 = vmatpush1.msra.mxu0 0.0
        %966 = vmatprep.subr.mxu0 0.0
        %967 = vmatpush1.msra.mxu0 0.0
        %968 = vmatprep.subr.mxu0 0.0
        %969 = vmatpush1.msra.mxu0 0.0
        %970 = vmatprep.mubr.f32.mxu0 0.0
        %971 = vmatmul.mubr.f32.gmra.mrb[0].mxu0 %v904
        %v972 = vpop.f32.mrb[0].mxu0
        %v973 = vadd.f32 0.0, %v972
        %v974 = vpop.f32.mrb[0].mxu0
        %975 = vdwg.mxu0
        %v977 = vsel %vm642, %v973, 0
        %979 = vmatprep.subr.mxu0 0.0
        %980 = vmatpush1.msra.mxu0 %v636
        %981 = vmatprep.subr.mxu0 0.0
        %982 = vmatpush1.msra.mxu0 0.0
        %983 = vmatprep.subr.mxu0 0.0
        %984 = vmatpush1.msra.mxu0 0.0
        %985 = vmatprep.subr.mxu0 0.0
        %986 = vmatpush1.msra.mxu0 0.0
        %987 = vmatprep.subr.mxu0 0.0
        %988 = vmatpush1.msra.mxu0 0.0
        %989 = vmatprep.subr.mxu0 0.0
        %990 = vmatpush1.msra.mxu0 0.0
        %991 = vmatprep.subr.mxu0 0.0
        %992 = vmatpush1.msra.mxu0 0.0
        %993 = vmatprep.subr.mxu0 0.0
        %994 = vmatpush1.msra.mxu0 0.0
        %995 = vmatprep.subr.mxu0 0.0
        %996 = vmatpush1.msra.mxu0 0.0
        %997 = vmatprep.subr.mxu0 0.0
        %998 = vmatpush1.msra.mxu0 0.0
        %999 = vmatprep.subr.mxu0 0.0
        %1000 = vmatpush1.msra.mxu0 0.0
        %1001 = vmatprep.subr.mxu0 0.0
        %1002 = vmatpush1.msra.mxu0 0.0
        %1003 = vmatprep.subr.mxu0 0.0
        %1004 = vmatpush1.msra.mxu0 0.0
        %1005 = vmatprep.subr.mxu0 0.0
        %1006 = vmatpush1.msra.mxu0 0.0
        %1007 = vmatprep.subr.mxu0 0.0
        %1008 = vmatpush1.msra.mxu0 0.0
        %1009 = vmatprep.subr.mxu0 0.0
        %1010 = vmatpush1.msra.mxu0 0.0
        %1011 = vmatprep.subr.mxu0 0.0
        %1012 = vmatpush1.msra.mxu0 0.0
        %1013 = vmatprep.subr.mxu0 0.0
        %1014 = vmatpush1.msra.mxu0 0.0
        %1015 = vmatprep.subr.mxu0 0.0
        %1016 = vmatpush1.msra.mxu0 0.0
        %1017 = vmatprep.subr.mxu0 0.0
        %1018 = vmatpush1.msra.mxu0 0.0
        %1019 = vmatprep.subr.mxu0 0.0
        %1020 = vmatpush1.msra.mxu0 0.0
        %1021 = vmatprep.subr.mxu0 0.0
        %1022 = vmatpush1.msra.mxu0 0.0
        %1023 = vmatprep.subr.mxu0 0.0
        %1024 = vmatpush1.msra.mxu0 0.0
        %1025 = vmatprep.subr.mxu0 0.0
        %1026 = vmatpush1.msra.mxu0 0.0
        %1027 = vmatprep.subr.mxu0 0.0
        %1028 = vmatpush1.msra.mxu0 0.0
        %1029 = vmatprep.subr.mxu0 0.0
        %1030 = vmatpush1.msra.mxu0 0.0
        %1031 = vmatprep.subr.mxu0 0.0
        %1032 = vmatpush1.msra.mxu0 0.0
        %1033 = vmatprep.subr.mxu0 0.0
        %1034 = vmatpush1.msra.mxu0 0.0
        %1035 = vmatprep.subr.mxu0 0.0
        %1036 = vmatpush1.msra.mxu0 0.0
        %1037 = vmatprep.subr.mxu0 0.0
        %1038 = vmatpush1.msra.mxu0 0.0
        %1039 = vmatprep.subr.mxu0 0.0
        %1040 = vmatpush1.msra.mxu0 0.0
        %1041 = vmatprep.subr.mxu0 0.0
        %1042 = vmatpush1.msra.mxu0 0.0
        %1043 = vmatprep.mubr.f32.mxu0 0.0
        %1044 = vmatmul.mubr.f32.gmra.mrb[0].mxu0 %v977
        %v1045 = vpop.f32.mrb[0].mxu0
        %v1046 = vadd.f32 0.0, %v1045
        %v1047 = vpop.f32.mrb[0].mxu0
        %1048 = vdwg.mxu0
        %v1050 = vsel %vm642, %v804, 0
        %1052 = vmatprep.subr.mxu0 0.0
        %1053 = vmatpush1.msra.mxu0 %v635
        %1054 = vmatprep.subr.mxu0 0.0
        %1055 = vmatpush1.msra.mxu0 0.0
        %1056 = vmatprep.subr.mxu0 0.0
        %1057 = vmatpush1.msra.mxu0 0.0
        %1058 = vmatprep.subr.mxu0 0.0
        %1059 = vmatpush1.msra.mxu0 0.0
        %1060 = vmatprep.subr.mxu0 0.0
        %1061 = vmatpush1.msra.mxu0 0.0
        %1062 = vmatprep.subr.mxu0 0.0
        %1063 = vmatpush1.msra.mxu0 0.0
        %1064 = vmatprep.subr.mxu0 0.0
        %1065 = vmatpush1.msra.mxu0 0.0
        %1066 = vmatprep.subr.mxu0 0.0
        %1067 = vmatpush1.msra.mxu0 0.0
        %1068 = vmatprep.subr.mxu0 0.0
        %1069 = vmatpush1.msra.mxu0 0.0
        %1070 = vmatprep.subr.mxu0 0.0
        %1071 = vmatpush1.msra.mxu0 0.0
        %1072 = vmatprep.subr.mxu0 0.0
        %1073 = vmatpush1.msra.mxu0 0.0
        %1074 = vmatprep.subr.mxu0 0.0
        %1075 = vmatpush1.msra.mxu0 0.0
        %1076 = vmatprep.subr.mxu0 0.0
        %1077 = vmatpush1.msra.mxu0 0.0
        %1078 = vmatprep.subr.mxu0 0.0
        %1079 = vmatpush1.msra.mxu0 0.0
        %1080 = vmatprep.subr.mxu0 0.0
        %1081 = vmatpush1.msra.mxu0 0.0
        %1082 = vmatprep.subr.mxu0 0.0
        %1083 = vmatpush1.msra.mxu0 0.0
        %1084 = vmatprep.subr.mxu0 0.0
        %1085 = vmatpush1.msra.mxu0 0.0
        %1086 = vmatprep.subr.mxu0 0.0
        %1087 = vmatpush1.msra.mxu0 0.0
        %1088 = vmatprep.subr.mxu0 0.0
        %1089 = vmatpush1.msra.mxu0 0.0
        %1090 = vmatprep.subr.mxu0 0.0
        %1091 = vmatpush1.msra.mxu0 0.0
        %1092 = vmatprep.subr.mxu0 0.0
        %1093 = vmatpush1.msra.mxu0 0.0
        %1094 = vmatprep.subr.mxu0 0.0
        %1095 = vmatpush1.msra.mxu0 0.0
        %1096 = vmatprep.subr.mxu0 0.0
        %1097 = vmatpush1.msra.mxu0 0.0
        %1098 = vmatprep.subr.mxu0 0.0
        %1099 = vmatpush1.msra.mxu0 0.0
        %1100 = vmatprep.subr.mxu0 0.0
        %1101 = vmatpush1.msra.mxu0 0.0
        %1102 = vmatprep.subr.mxu0 0.0
        %1103 = vmatpush1.msra.mxu0 0.0
        %1104 = vmatprep.subr.mxu0 0.0
        %1105 = vmatpush1.msra.mxu0 0.0
        %1106 = vmatprep.subr.mxu0 0.0
        %1107 = vmatpush1.msra.mxu0 0.0
        %1108 = vmatprep.subr.mxu0 0.0
        %1109 = vmatpush1.msra.mxu0 0.0
        %1110 = vmatprep.subr.mxu0 0.0
        %1111 = vmatpush1.msra.mxu0 0.0
        %1112 = vmatprep.subr.mxu0 0.0
        %1113 = vmatpush1.msra.mxu0 0.0
        %1114 = vmatprep.subr.mxu0 0.0
        %1115 = vmatpush1.msra.mxu0 0.0
        %1116 = vmatprep.mubr.f32.mxu0 0.0
        %1117 = vmatmul.mubr.f32.gmra.mrb[0].mxu0 %v1050
        %v1118 = vpop.f32.mrb[0].mxu0
        %v1119 = vadd.f32 %v1046, %v1118
        %v1120 = vpop.f32.mrb[0].mxu0
        %1121 = vdwg.mxu0
        %1122 = vrot.lane.b32.xlu0 %v627, 112
        %v1123 = vpop.permute.xlu0 %1122
        %1124 = vrot.lane.b32.xlu0 %v627, 80
        %v1125 = vpop.permute.xlu0 %1124
        %v1126 = vsel %vm642, %v1123, 0
        %v1128 = vsel %vm642, %v1125, 0
        %1130 = vmatprep.subr.mxu0 0.0
        %1131 = vmatpush1.xpose.msra.mxu0 %v1128
        %1132 = vmatprep.subr.mxu0 0.0
        %1133 = vmatpush1.xpose.msra.mxu0 0.0
        %1134 = vmatprep.subr.mxu0 0.0
        %1135 = vmatpush1.xpose.msra.mxu0 0.0
        %1136 = vmatprep.subr.mxu0 0.0
        %1137 = vmatpush1.xpose.msra.mxu0 0.0
        %1138 = vmatprep.subr.mxu0 0.0
        %1139 = vmatpush1.xpose.msra.mxu0 0.0
        %1140 = vmatprep.subr.mxu0 0.0
        %1141 = vmatpush1.xpose.msra.mxu0 0.0
        %1142 = vmatprep.subr.mxu0 0.0
        %1143 = vmatpush1.xpose.msra.mxu0 0.0
        %1144 = vmatprep.subr.mxu0 0.0
        %1145 = vmatpush1.xpose.msra.mxu0 0.0
        %1146 = vmatprep.subr.mxu0 0.0
        %1147 = vmatpush1.xpose.msra.mxu0 0.0
        %1148 = vmatprep.subr.mxu0 0.0
        %1149 = vmatpush1.xpose.msra.mxu0 0.0
        %1150 = vmatprep.subr.mxu0 0.0
        %1151 = vmatpush1.xpose.msra.mxu0 0.0
        %1152 = vmatprep.subr.mxu0 0.0
        %1153 = vmatpush1.xpose.msra.mxu0 0.0
        %1154 = vmatprep.subr.mxu0 0.0
        %1155 = vmatpush1.xpose.msra.mxu0 0.0
        %1156 = vmatprep.subr.mxu0 0.0
        %1157 = vmatpush1.xpose.msra.mxu0 0.0
        %1158 = vmatprep.subr.mxu0 0.0
        %1159 = vmatpush1.xpose.msra.mxu0 0.0
        %1160 = vmatprep.subr.mxu0 0.0
        %1161 = vmatpush1.xpose.msra.mxu0 0.0
        %1162 = vmatprep.subr.mxu0 0.0
        %1163 = vmatpush1.xpose.msra.mxu0 0.0
        %1164 = vmatprep.subr.mxu0 0.0
        %1165 = vmatpush1.xpose.msra.mxu0 0.0
        %1166 = vmatprep.subr.mxu0 0.0
        %1167 = vmatpush1.xpose.msra.mxu0 0.0
        %1168 = vmatprep.subr.mxu0 0.0
        %1169 = vmatpush1.xpose.msra.mxu0 0.0
        %1170 = vmatprep.subr.mxu0 0.0
        %1171 = vmatpush1.xpose.msra.mxu0 0.0
        %1172 = vmatprep.subr.mxu0 0.0
        %1173 = vmatpush1.xpose.msra.mxu0 0.0
        %1174 = vmatprep.subr.mxu0 0.0
        %1175 = vmatpush1.xpose.msra.mxu0 0.0
        %1176 = vmatprep.subr.mxu0 0.0
        %1177 = vmatpush1.xpose.msra.mxu0 0.0
        %1178 = vmatprep.subr.mxu0 0.0
        %1179 = vmatpush1.xpose.msra.mxu0 0.0
        %1180 = vmatprep.subr.mxu0 0.0
        %1181 = vmatpush1.xpose.msra.mxu0 0.0
        %1182 = vmatprep.subr.mxu0 0.0
        %1183 = vmatpush1.xpose.msra.mxu0 0.0
        %1184 = vmatprep.subr.mxu0 0.0
        %1185 = vmatpush1.xpose.msra.mxu0 0.0
        %1186 = vmatprep.subr.mxu0 0.0
        %1187 = vmatpush1.xpose.msra.mxu0 0.0
        %1188 = vmatprep.subr.mxu0 0.0
        %1189 = vmatpush1.xpose.msra.mxu0 0.0
        %1190 = vmatprep.subr.mxu0 0.0
        %1191 = vmatpush1.xpose.msra.mxu0 0.0
        %1192 = vmatprep.subr.mxu0 0.0
        %1193 = vmatpush1.xpose.msra.mxu0 0.0
        %1194 = vmatprep.mubr.f32.mxu0 0.0
        %1195 = vmatmul.mubr.f32.gmra.mrb[0].mxu0 %v1126
        %v1196 = vpop.f32.mrb[0].mxu0
        %v1197 = vadd.f32 %v633, %v1196
        %v1198 = vpop.f32.mrb[0].mxu0
        %1199 = vdwg.mxu0
        %v1200 = vsel %vm642, %v1197, -inf
        %1201 = vmax.xlane.f32.xlu0 %v1200
        %v1202 = vpop.xlane.xlu0 %1201
        %v1203 = vsub.f32 %v1197, %v1202
        %v1204 = vmul.f32 %v1203, 1.442695
        %v1205 = vpow.pop %v1204
        %v1206 = vmul.f32 %v1205, %v630
        %v1207 = vsel %vm642, %v1206, 0.0
        %1208 = vadd.xlane.f32.xlu0 %v1207
        %v1209 = vpop.xlane.xlu0 %1208
        %v1210 = vmax.f32 %v1209, 1e-09
        %v1211 = vrcp.pop %v1210
        %v1212 = vmul.f32 %v1206, %v1211
        %s1213 = scalar_lea.vmem %s493, 16 [#allocation5]
        %1214 = vst.msk [vmem:[%s1213] sm:$0xff] %vm642, %v1212
        %1215 = vrot.lane.b32.xlu0 %v627, 48
        %v1216 = vpop.permute.xlu0 %1215
        %v1219 = vsel %vm642, %v1212, 0
        %1221 = vmatprep.subr.mxu0 0.0
        %1222 = vmatpush1.msra.mxu0 %v1216
        %1223 = vmatprep.subr.mxu0 0.0
        %1224 = vmatpush1.msra.mxu0 0.0
        %1225 = vmatprep.subr.mxu0 0.0
        %1226 = vmatpush1.msra.mxu0 0.0
        %1227 = vmatprep.subr.mxu0 0.0
        %1228 = vmatpush1.msra.mxu0 0.0
        %1229 = vmatprep.subr.mxu0 0.0
        %1230 = vmatpush1.msra.mxu0 0.0
        %1231 = vmatprep.subr.mxu0 0.0
        %1232 = vmatpush1.msra.mxu0 0.0
        %1233 = vmatprep.subr.mxu0 0.0
        %1234 = vmatpush1.msra.mxu0 0.0
        %1235 = vmatprep.subr.mxu0 0.0
        %1236 = vmatpush1.msra.mxu0 0.0
        %1237 = vmatprep.subr.mxu0 0.0
        %1238 = vmatpush1.msra.mxu0 0.0
        %1239 = vmatprep.subr.mxu0 0.0
        %1240 = vmatpush1.msra.mxu0 0.0
        %1241 = vmatprep.subr.mxu0 0.0
        %1242 = vmatpush1.msra.mxu0 0.0
        %1243 = vmatprep.subr.mxu0 0.0
        %1244 = vmatpush1.msra.mxu0 0.0
        %1245 = vmatprep.subr.mxu0 0.0
        %1246 = vmatpush1.msra.mxu0 0.0
        %1247 = vmatprep.subr.mxu0 0.0
        %1248 = vmatpush1.msra.mxu0 0.0
        %1249 = vmatprep.subr.mxu0 0.0
        %1250 = vmatpush1.msra.mxu0 0.0
        %1251 = vmatprep.subr.mxu0 0.0
        %1252 = vmatpush1.msra.mxu0 0.0
        %1253 = vmatprep.subr.mxu0 0.0
        %1254 = vmatpush1.msra.mxu0 0.0
        %1255 = vmatprep.subr.mxu0 0.0
        %1256 = vmatpush1.msra.mxu0 0.0
        %1257 = vmatprep.subr.mxu0 0.0
        %1258 = vmatpush1.msra.mxu0 0.0
        %1259 = vmatprep.subr.mxu0 0.0
        %1260 = vmatpush1.msra.mxu0 0.0
        %1261 = vmatprep.subr.mxu0 0.0
        %1262 = vmatpush1.msra.mxu0 0.0
        %1263 = vmatprep.subr.mxu0 0.0
        %1264 = vmatpush1.msra.mxu0 0.0
        %1265 = vmatprep.subr.mxu0 0.0
        %1266 = vmatpush1.msra.mxu0 0.0
        %1267 = vmatprep.subr.mxu0 0.0
        %1268 = vmatpush1.msra.mxu0 0.0
        %1269 = vmatprep.subr.mxu0 0.0
        %1270 = vmatpush1.msra.mxu0 0.0
        %1271 = vmatprep.subr.mxu0 0.0
        %1272 = vmatpush1.msra.mxu0 0.0
        %1273 = vmatprep.subr.mxu0 0.0
        %1274 = vmatpush1.msra.mxu0 0.0
        %1275 = vmatprep.subr.mxu0 0.0
        %1276 = vmatpush1.msra.mxu0 0.0
        %1277 = vmatprep.subr.mxu0 0.0
        %1278 = vmatpush1.msra.mxu0 0.0
        %1279 = vmatprep.subr.mxu0 0.0
        %1280 = vmatpush1.msra.mxu0 0.0
        %1281 = vmatprep.subr.mxu0 0.0
        %1282 = vmatpush1.msra.mxu0 0.0
        %1283 = vmatprep.subr.mxu0 0.0
        %1284 = vmatpush1.msra.mxu0 0.0
        %1285 = vmatprep.mubr.f32.mxu0 0.0
        %1286 = vmatmul.mubr.f32.gmra.mrb[0].mxu0 %v1219
        %v1287 = vpop.f32.mrb[0].mxu0
        %v1288 = vadd.f32 0.0, %v1287
        %v1289 = vpop.f32.mrb[0].mxu0
        %1290 = vdwg.mxu0
        %v1292 = vsel %vm642, %v1288, 0
        %1294 = vmatprep.subr.mxu0 0.0
        %1295 = vmatpush1.msra.mxu0 %v637
        %1296 = vmatprep.subr.mxu0 0.0
        %1297 = vmatpush1.msra.mxu0 0.0
        %1298 = vmatprep.subr.mxu0 0.0
        %1299 = vmatpush1.msra.mxu0 0.0
        %1300 = vmatprep.subr.mxu0 0.0
        %1301 = vmatpush1.msra.mxu0 0.0
        %1302 = vmatprep.subr.mxu0 0.0
        %1303 = vmatpush1.msra.mxu0 0.0
        %1304 = vmatprep.subr.mxu0 0.0
        %1305 = vmatpush1.msra.mxu0 0.0
        %1306 = vmatprep.subr.mxu0 0.0
        %1307 = vmatpush1.msra.mxu0 0.0
        %1308 = vmatprep.subr.mxu0 0.0
        %1309 = vmatpush1.msra.mxu0 0.0
        %1310 = vmatprep.subr.mxu0 0.0
        %1311 = vmatpush1.msra.mxu0 0.0
        %1312 = vmatprep.subr.mxu0 0.0
        %1313 = vmatpush1.msra.mxu0 0.0
        %1314 = vmatprep.subr.mxu0 0.0
        %1315 = vmatpush1.msra.mxu0 0.0
        %1316 = vmatprep.subr.mxu0 0.0
        %1317 = vmatpush1.msra.mxu0 0.0
        %1318 = vmatprep.subr.mxu0 0.0
        %1319 = vmatpush1.msra.mxu0 0.0
        %1320 = vmatprep.subr.mxu0 0.0
        %1321 = vmatpush1.msra.mxu0 0.0
        %1322 = vmatprep.subr.mxu0 0.0
        %1323 = vmatpush1.msra.mxu0 0.0
        %1324 = vmatprep.subr.mxu0 0.0
        %1325 = vmatpush1.msra.mxu0 0.0
        %1326 = vmatprep.subr.mxu0 0.0
        %1327 = vmatpush1.msra.mxu0 0.0
        %1328 = vmatprep.subr.mxu0 0.0
        %1329 = vmatpush1.msra.mxu0 0.0
        %1330 = vmatprep.subr.mxu0 0.0
        %1331 = vmatpush1.msra.mxu0 0.0
        %1332 = vmatprep.subr.mxu0 0.0
        %1333 = vmatpush1.msra.mxu0 0.0
        %1334 = vmatprep.subr.mxu0 0.0
        %1335 = vmatpush1.msra.mxu0 0.0
        %1336 = vmatprep.subr.mxu0 0.0
        %1337 = vmatpush1.msra.mxu0 0.0
        %1338 = vmatprep.subr.mxu0 0.0
        %1339 = vmatpush1.msra.mxu0 0.0
        %1340 = vmatprep.subr.mxu0 0.0
        %1341 = vmatpush1.msra.mxu0 0.0
        %1342 = vmatprep.subr.mxu0 0.0
        %1343 = vmatpush1.msra.mxu0 0.0
        %1344 = vmatprep.subr.mxu0 0.0
        %1345 = vmatpush1.msra.mxu0 0.0
        %1346 = vmatprep.subr.mxu0 0.0
        %1347 = vmatpush1.msra.mxu0 0.0
        %1348 = vmatprep.subr.mxu0 0.0
        %1349 = vmatpush1.msra.mxu0 0.0
        %1350 = vmatprep.subr.mxu0 0.0
        %1351 = vmatpush1.msra.mxu0 0.0
        %1352 = vmatprep.subr.mxu0 0.0
        %1353 = vmatpush1.msra.mxu0 0.0
        %1354 = vmatprep.subr.mxu0 0.0
        %1355 = vmatpush1.msra.mxu0 0.0
        %1356 = vmatprep.subr.mxu0 0.0
        %1357 = vmatpush1.msra.mxu0 0.0
        %1358 = vmatprep.mubr.f32.mxu0 0.0
        %1359 = vmatmul.mubr.f32.gmra.mrb[0].mxu0 %v1292
        %v1360 = vpop.f32.mrb[0].mxu0
        %v1361 = vadd.f32 0.0, %v1360
        %v1362 = vpop.f32.mrb[0].mxu0
        %1363 = vdwg.mxu0
        %v1364 = vadd.f32 %v1119, %v1361
        %1365 = vrot.lane.b32.xlu0 %v627, 104
        %v1366 = vpop.permute.xlu0 %1365
        %1367 = vrot.lane.b32.xlu0 %v627, 72
        %v1368 = vpop.permute.xlu0 %1367
        %v1369 = vsel %vm642, %v1366, 0
        %v1371 = vsel %vm642, %v1368, 0
        %1373 = vmatprep.subr.mxu0 0.0
        %1374 = vmatpush1.xpose.msra.mxu0 %v1371
        %1375 = vmatprep.subr.mxu0 0.0
        %1376 = vmatpush1.xpose.msra.mxu0 0.0
        %1377 = vmatprep.subr.mxu0 0.0
        %1378 = vmatpush1.xpose.msra.mxu0 0.0
        %1379 = vmatprep.subr.mxu0 0.0
        %1380 = vmatpush1.xpose.msra.mxu0 0.0
        %1381 = vmatprep.subr.mxu0 0.0
        %1382 = vmatpush1.xpose.msra.mxu0 0.0
        %1383 = vmatprep.subr.mxu0 0.0
        %1384 = vmatpush1.xpose.msra.mxu0 0.0
        %1385 = vmatprep.subr.mxu0 0.0
        %1386 = vmatpush1.xpose.msra.mxu0 0.0
        %1387 = vmatprep.subr.mxu0 0.0
        %1388 = vmatpush1.xpose.msra.mxu0 0.0
        %1389 = vmatprep.subr.mxu0 0.0
        %1390 = vmatpush1.xpose.msra.mxu0 0.0
        %1391 = vmatprep.subr.mxu0 0.0
        %1392 = vmatpush1.xpose.msra.mxu0 0.0
        %1393 = vmatprep.subr.mxu0 0.0
        %1394 = vmatpush1.xpose.msra.mxu0 0.0
        %1395 = vmatprep.subr.mxu0 0.0
        %1396 = vmatpush1.xpose.msra.mxu0 0.0
        %1397 = vmatprep.subr.mxu0 0.0
        %1398 = vmatpush1.xpose.msra.mxu0 0.0
        %1399 = vmatprep.subr.mxu0 0.0
        %1400 = vmatpush1.xpose.msra.mxu0 0.0
        %1401 = vmatprep.subr.mxu0 0.0
        %1402 = vmatpush1.xpose.msra.mxu0 0.0
        %1403 = vmatprep.subr.mxu0 0.0
        %1404 = vmatpush1.xpose.msra.mxu0 0.0
        %1405 = vmatprep.subr.mxu0 0.0
        %1406 = vmatpush1.xpose.msra.mxu0 0.0
        %1407 = vmatprep.subr.mxu0 0.0
        %1408 = vmatpush1.xpose.msra.mxu0 0.0
        %1409 = vmatprep.subr.mxu0 0.0
        %1410 = vmatpush1.xpose.msra.mxu0 0.0
        %1411 = vmatprep.subr.mxu0 0.0
        %1412 = vmatpush1.xpose.msra.mxu0 0.0
        %1413 = vmatprep.subr.mxu0 0.0
        %1414 = vmatpush1.xpose.msra.mxu0 0.0
        %1415 = vmatprep.subr.mxu0 0.0
        %1416 = vmatpush1.xpose.msra.mxu0 0.0
        %1417 = vmatprep.subr.mxu0 0.0
        %1418 = vmatpush1.xpose.msra.mxu0 0.0
        %1419 = vmatprep.subr.mxu0 0.0
        %1420 = vmatpush1.xpose.msra.mxu0 0.0
        %1421 = vmatprep.subr.mxu0 0.0
        %1422 = vmatpush1.xpose.msra.mxu0 0.0
        %1423 = vmatprep.subr.mxu0 0.0
        %1424 = vmatpush1.xpose.msra.mxu0 0.0
        %1425 = vmatprep.subr.mxu0 0.0
        %1426 = vmatpush1.xpose.msra.mxu0 0.0
        %1427 = vmatprep.subr.mxu0 0.0
        %1428 = vmatpush1.xpose.msra.mxu0 0.0
        %1429 = vmatprep.subr.mxu0 0.0
        %1430 = vmatpush1.xpose.msra.mxu0 0.0
        %1431 = vmatprep.subr.mxu0 0.0
        %1432 = vmatpush1.xpose.msra.mxu0 0.0
        %1433 = vmatprep.subr.mxu0 0.0
        %1434 = vmatpush1.xpose.msra.mxu0 0.0
        %1435 = vmatprep.subr.mxu0 0.0
        %1436 = vmatpush1.xpose.msra.mxu0 0.0
        %1437 = vmatprep.mubr.f32.mxu0 0.0
        %1438 = vmatmul.mubr.f32.gmra.mrb[0].mxu0 %v1369
        %v1439 = vpop.f32.mrb[0].mxu0
        %v1440 = vadd.f32 %v634, %v1439
        %v1441 = vpop.f32.mrb[0].mxu0
        %1442 = vdwg.mxu0
        %v1443 = vsel %vm642, %v1440, -inf
        %1444 = vmax.xlane.f32.xlu0 %v1443
        %v1445 = vpop.xlane.xlu0 %1444
        %v1446 = vsub.f32 %v1440, %v1445
        %v1447 = vmul.f32 %v1446, 1.442695
        %v1448 = vpow.pop %v1447
        %v1449 = vmul.f32 %v1448, %v630
        %v1450 = vsel %vm642, %v1449, 0.0
        %1451 = vadd.xlane.f32.xlu0 %v1450
        %v1452 = vpop.xlane.xlu0 %1451
        %v1453 = vmax.f32 %v1452, 1e-09
        %v1454 = vrcp.pop %v1453
        %v1455 = vmul.f32 %v1449, %v1454
        %s1456 = scalar_lea.vmem %s493, 24 [#allocation5]
        %1457 = vst.msk [vmem:[%s1456] sm:$0xff] %vm642, %v1455
        %1458 = vrot.lane.b32.xlu0 %v627, 40
        %v1459 = vpop.permute.xlu0 %1458
        %v1462 = vsel %vm642, %v1455, 0
        %1464 = vmatprep.subr.mxu0 0.0
        %1465 = vmatpush1.msra.mxu0 %v1459
        %1466 = vmatprep.subr.mxu0 0.0
        %1467 = vmatpush1.msra.mxu0 0.0
        %1468 = vmatprep.subr.mxu0 0.0
        %1469 = vmatpush1.msra.mxu0 0.0
        %1470 = vmatprep.subr.mxu0 0.0
        %1471 = vmatpush1.msra.mxu0 0.0
        %1472 = vmatprep.subr.mxu0 0.0
        %1473 = vmatpush1.msra.mxu0 0.0
        %1474 = vmatprep.subr.mxu0 0.0
        %1475 = vmatpush1.msra.mxu0 0.0
        %1476 = vmatprep.subr.mxu0 0.0
        %1477 = vmatpush1.msra.mxu0 0.0
        %1478 = vmatprep.subr.mxu0 0.0
        %1479 = vmatpush1.msra.mxu0 0.0
        %1480 = vmatprep.subr.mxu0 0.0
        %1481 = vmatpush1.msra.mxu0 0.0
        %1482 = vmatprep.subr.mxu0 0.0
        %1483 = vmatpush1.msra.mxu0 0.0
        %1484 = vmatprep.subr.mxu0 0.0
        %1485 = vmatpush1.msra.mxu0 0.0
        %1486 = vmatprep.subr.mxu0 0.0
        %1487 = vmatpush1.msra.mxu0 0.0
        %1488 = vmatprep.subr.mxu0 0.0
        %1489 = vmatpush1.msra.mxu0 0.0
        %1490 = vmatprep.subr.mxu0 0.0
        %1491 = vmatpush1.msra.mxu0 0.0
        %1492 = vmatprep.subr.mxu0 0.0
        %1493 = vmatpush1.msra.mxu0 0.0
        %1494 = vmatprep.subr.mxu0 0.0
        %1495 = vmatpush1.msra.mxu0 0.0
        %1496 = vmatprep.subr.mxu0 0.0
        %1497 = vmatpush1.msra.mxu0 0.0
        %1498 = vmatprep.subr.mxu0 0.0
        %1499 = vmatpush1.msra.mxu0 0.0
        %1500 = vmatprep.subr.mxu0 0.0
        %1501 = vmatpush1.msra.mxu0 0.0
        %1502 = vmatprep.subr.mxu0 0.0
        %1503 = vmatpush1.msra.mxu0 0.0
        %1504 = vmatprep.subr.mxu0 0.0
        %1505 = vmatpush1.msra.mxu0 0.0
        %1506 = vmatprep.subr.mxu0 0.0
        %1507 = vmatpush1.msra.mxu0 0.0
        %1508 = vmatprep.subr.mxu0 0.0
        %1509 = vmatpush1.msra.mxu0 0.0
        %1510 = vmatprep.subr.mxu0 0.0
        %1511 = vmatpush1.msra.mxu0 0.0
        %1512 = vmatprep.subr.mxu0 0.0
        %1513 = vmatpush1.msra.mxu0 0.0
        %1514 = vmatprep.subr.mxu0 0.0
        %1515 = vmatpush1.msra.mxu0 0.0
        %1516 = vmatprep.subr.mxu0 0.0
        %1517 = vmatpush1.msra.mxu0 0.0
        %1518 = vmatprep.subr.mxu0 0.0
        %1519 = vmatpush1.msra.mxu0 0.0
        %1520 = vmatprep.subr.mxu0 0.0
        %1521 = vmatpush1.msra.mxu0 0.0
        %1522 = vmatprep.subr.mxu0 0.0
        %1523 = vmatpush1.msra.mxu0 0.0
        %1524 = vmatprep.subr.mxu0 0.0
        %1525 = vmatpush1.msra.mxu0 0.0
        %1526 = vmatprep.subr.mxu0 0.0
        %1527 = vmatpush1.msra.mxu0 0.0
        %1528 = vmatprep.mubr.f32.mxu0 0.0
        %1529 = vmatmul.mubr.f32.gmra.mrb[0].mxu0 %v1462
        %v1530 = vpop.f32.mrb[0].mxu0
        %v1531 = vadd.f32 0.0, %v1530
        %v1532 = vpop.f32.mrb[0].mxu0
        %1533 = vdwg.mxu0
        %v1535 = vsel %vm642, %v1531, 0
        %1537 = vmatprep.subr.mxu0 0.0
        %1538 = vmatpush1.msra.mxu0 %v638
        %1539 = vmatprep.subr.mxu0 0.0
        %1540 = vmatpush1.msra.mxu0 0.0
        %1541 = vmatprep.subr.mxu0 0.0
        %1542 = vmatpush1.msra.mxu0 0.0
        %1543 = vmatprep.subr.mxu0 0.0
        %1544 = vmatpush1.msra.mxu0 0.0
        %1545 = vmatprep.subr.mxu0 0.0
        %1546 = vmatpush1.msra.mxu0 0.0
        %1547 = vmatprep.subr.mxu0 0.0
        %1548 = vmatpush1.msra.mxu0 0.0
        %1549 = vmatprep.subr.mxu0 0.0
        %1550 = vmatpush1.msra.mxu0 0.0
        %1551 = vmatprep.subr.mxu0 0.0
        %1552 = vmatpush1.msra.mxu0 0.0
        %1553 = vmatprep.subr.mxu0 0.0
        %1554 = vmatpush1.msra.mxu0 0.0
        %1555 = vmatprep.subr.mxu0 0.0
        %1556 = vmatpush1.msra.mxu0 0.0
        %1557 = vmatprep.subr.mxu0 0.0
        %1558 = vmatpush1.msra.mxu0 0.0
        %1559 = vmatprep.subr.mxu0 0.0
        %1560 = vmatpush1.msra.mxu0 0.0
        %1561 = vmatprep.subr.mxu0 0.0
        %1562 = vmatpush1.msra.mxu0 0.0
        %1563 = vmatprep.subr.mxu0 0.0
        %1564 = vmatpush1.msra.mxu0 0.0
        %1565 = vmatprep.subr.mxu0 0.0
        %1566 = vmatpush1.msra.mxu0 0.0
        %1567 = vmatprep.subr.mxu0 0.0
        %1568 = vmatpush1.msra.mxu0 0.0
        %1569 = vmatprep.subr.mxu0 0.0
        %1570 = vmatpush1.msra.mxu0 0.0
        %1571 = vmatprep.subr.mxu0 0.0
        %1572 = vmatpush1.msra.mxu0 0.0
        %1573 = vmatprep.subr.mxu0 0.0
        %1574 = vmatpush1.msra.mxu0 0.0
        %1575 = vmatprep.subr.mxu0 0.0
        %1576 = vmatpush1.msra.mxu0 0.0
        %1577 = vmatprep.subr.mxu0 0.0
        %1578 = vmatpush1.msra.mxu0 0.0
        %1579 = vmatprep.subr.mxu0 0.0
        %1580 = vmatpush1.msra.mxu0 0.0
        %1581 = vmatprep.subr.mxu0 0.0
        %1582 = vmatpush1.msra.mxu0 0.0
        %1583 = vmatprep.subr.mxu0 0.0
        %1584 = vmatpush1.msra.mxu0 0.0
        %1585 = vmatprep.subr.mxu0 0.0
        %1586 = vmatpush1.msra.mxu0 0.0
        %1587 = vmatprep.subr.mxu0 0.0
        %1588 = vmatpush1.msra.mxu0 0.0
        %1589 = vmatprep.subr.mxu0 0.0
        %1590 = vmatpush1.msra.mxu0 0.0
        %1591 = vmatprep.subr.mxu0 0.0
        %1592 = vmatpush1.msra.mxu0 0.0
        %1593 = vmatprep.subr.mxu0 0.0
        %1594 = vmatpush1.msra.mxu0 0.0
        %1595 = vmatprep.subr.mxu0 0.0
        %1596 = vmatpush1.msra.mxu0 0.0
        %1597 = vmatprep.subr.mxu0 0.0
        %1598 = vmatpush1.msra.mxu0 0.0
        %1599 = vmatprep.subr.mxu0 0.0
        %1600 = vmatpush1.msra.mxu0 0.0
        %1601 = vmatprep.mubr.f32.mxu0 0.0
        %1602 = vmatmul.mubr.f32.gmra.mrb[0].mxu0 %v1535
        %v1603 = vpop.f32.mrb[0].mxu0
        %v1604 = vadd.f32 0.0, %v1603
        %v1605 = vpop.f32.mrb[0].mxu0
        %1606 = vdwg.mxu0
        %v1607 = vadd.f32 %v1364, %v1604
        %v1608 = vld [vmem:[%s526] sm:$0x1]
        %v1610 = vlaneseq
        %v1611 = vshrl.u32 %v1610, 7
        %v1612 = vsub.s32 0, %v1611
        %v1613 = vrot.slane %v1608, %v1612
        %v1615 = vadd.f32 %v1607, %v1613
        %v1616 = vmax.f32 %v1615, 0.0
        %v1617 = vadd.f32 %v544, %v1616
        %v1618 = vsel %vm556, %v1617, 0.0
        %1619 = vadd.xlane.f32.xlu0 %v1618
        %v1620 = vpop.xlane.xlu0 %1619
        %v1621 = vrcp.pop 32.0
        %v1622 = vmul.f32 %v1620, %v1621
        %v1623 = vsub.f32 %v1617, %v1622
        %v1624 = vmul.f32 %v1623, %v1623
        %v1625 = vsel %vm556, %v1624, 0.0
        %1626 = vadd.xlane.f32.xlu0 %v1625
        %v1627 = vpop.xlane.xlu0 %1626
        %v1628 = vmul.f32 %v1627, %v1621
        %v1629 = vadd.f32 %v1628, 1e-05
        %v1630 = vrsqrt.pop %v1629
        %v1631 = vmul.f32 %v1623, %v1630
        %v1632 = vld [vmem:[%s529] sm:$0x1]
        %v1634 = vlaneseq
        %v1635 = vshrl.u32 %v1634, 7
        %v1636 = vsub.s32 0, %v1635
        %v1637 = vrot.slane %v1632, %v1636
        %v1639 = vmul.f32 %v1631, %v1637
        %v1640 = vld [vmem:[%s532] sm:$0x1]
        %v1642 = vlaneseq
        %v1643 = vshrl.u32 %v1642, 7
        %v1644 = vsub.s32 0, %v1643
        %v1645 = vrot.slane %v1640, %v1644
        %v1647 = vadd.f32 %v1639, %v1645
        %1648 = vst.msk [vmem:[#allocation2] sm:$0xff] %vm556, %v1647
        %1649 = vst.msk [vmem:[%s486] sm:$0xff] %vm556, %v1647
        %s1650 = sand.u32 %s290, 1
        %s1651 = scalar_lea.sflag [#allocation4], %s1650
        %s1652 = sand.u32 %s290, 1
        %s1653 = smul.addr %s1652, 8
        %s1654 = scalar_lea.vmem [#allocation3], %s1653
        %s1655 = sand.u32 %s320, 1
        %s1656 = scalar_lea.sflag [#allocation6], %s1655
        %s1657 = sand.u32 %s320, 1
        %s1658 = smul.addr %s1657, 32
        %s1659 = scalar_lea.vmem [#allocation5], %s1658
        // Predicated region
        $region61: #{_encoder_forward.1} parent=55 // pred_check
          %p1660 = pneg %p300
        $region62: #{_encoder_forward.1} parent=55 // pred_check_branch
          %1662 = sbr.rel (%p1660) target = $region64
        $region63: #{_encoder_forward.1} parent=55 // pred_region
          %s1663 = smul.u32 %s33, 2
          %s1664 = sadd.s32 %s1663, %s32
          %s1666 = ssub.s32 128, 128
          %1667 = vsyncadd %s1651, %s1666
          %s1668 = smul.addr %s1664, 128
          %s1669 = scalar_lea.hbm %s9, %s1668
          %s1671 = sshll.u32 %s1654, 4
          %s1672 = int_to_ptr.vmem [resolvable:$true] %s1671
          %1674 = dma.vmem_to_hbm [thread:$0]  %s1672, 128, %s1669, %s1651
        $region64: #{_encoder_forward.1} parent=55 // pred_fallthru
          _
        // Predicated region
        $region65: #{_encoder_forward.1} parent=55 // pred_check
          %p1675 = pneg %p330
        $region66: #{_encoder_forward.1} parent=55 // pred_check_branch
          %1677 = sbr.rel (%p1675) target = $region68
        $region67: #{_encoder_forward.1} parent=55 // pred_region
          %s1678 = smul.u32 %s33, 2
          %s1679 = sadd.s32 %s1678, %s32
          %s1681 = ssub.s32 512, 512
          %1682 = vsyncadd %s1656, %s1681
          %s1683 = smul.addr %s1679, 4
          %s1684 = smul.addr %s1683, 128
          %s1685 = scalar_lea.hbm %s10, %s1684
          %s1686 = sshll.u32 %s1659, 4
          %s1687 = int_to_ptr.vmem [resolvable:$true] %s1686
          %1692 = dma.vmem_to_hbm [thread:$0]  %s1687, 512, %s1685, %s1656, 128, 128, 8
        $region68: #{_encoder_forward.1} parent=55 // pred_fallthru
          _
      $region56: #{_encoder_forward.1} parent=5 // pred_fallthru
        _
      %p1693 = scmp.le.s32.totalorder 2, %s23
      // Predicated region
      $region69: #{_encoder_forward.1} parent=5 // pred_check
        %p1694 = pneg %p1693
      $region70: #{_encoder_forward.1} parent=5 // pred_check_branch
        %1696 = sbr.rel (%p1694) target = $region72
      $region71: #{_encoder_forward.1} parent=5 // pred_region
        %s1697 = ssub.s32 %s23, 2
        // Predicated region
        $region73: #{_encoder_forward.1} parent=71 // pred_check
          %p1698 = pneg %p306
        $region74: #{_encoder_forward.1} parent=71 // pred_check_branch
          %1700 = sbr.rel (%p1698) target = $region76
        $region75: #{_encoder_forward.1} parent=71 // pred_region
          %s1701 = sand.u32 %s291, 1
          %s1702 = scalar_lea.sflag [#allocation4], %s1701
          %s1703 = sand.u32 %s291, 1
          %s1704 = smul.addr %s1703, 8
          %s1705 = scalar_lea.vmem [#allocation3], %s1704
          %1706 = dma.done %s1702, 128
        $region76: #{_encoder_forward.1} parent=71 // pred_fallthru
          _
        // Predicated region
        $region77: #{_encoder_forward.1} parent=71 // pred_check
          %p1707 = pneg %p336
        $region78: #{_encoder_forward.1} parent=71 // pred_check_branch
          %1709 = sbr.rel (%p1707) target = $region80
        $region79: #{_encoder_forward.1} parent=71 // pred_region
          %s1710 = sand.u32 %s321, 1
          %s1711 = scalar_lea.sflag [#allocation6], %s1710
          %s1712 = sand.u32 %s321, 1
          %s1713 = smul.addr %s1712, 32
          %s1714 = scalar_lea.vmem [#allocation5], %s1713
          %1715 = dma.done %s1711, 512
        $region80: #{_encoder_forward.1} parent=71 // pred_fallthru
          _
      $region72: #{_encoder_forward.1} parent=5 // pred_fallthru
        _
    $region6: #{_encoder_forward.1} parent=1 // loop_footer
      %s27 = sadd.s32 1, %s23
    $region7: #{_encoder_forward.1} parent=1 // loop_footer_branch
      %22 = sbr.rel target = $region3
    $region8: #{_encoder_forward.1} parent=1 // loop_exit
      _
    %1716 = vsyncpa [#allocation4], 1
    %s1717 = scalar_lea.sflag [#allocation4], 1
    %1718 = vsyncpa %s1717, 1
    %1719 = vsyncpa [#allocation6], 1
    %s1720 = scalar_lea.sflag [#allocation6], 1
    %1721 = vsyncpa %s1720, 1

</llo_original>
